<compile_context>
chip_gen: v7x
topology: tpu7x:2x2x1
jax: 0.10.0
libtpu: 0.0.40
codegen_flags: <defaults>
</compile_context>

<pallas_src>
import functools

import jax
import jax.numpy as jnp
import numpy as np
from jax.experimental import pallas as pl
from jax.experimental.pallas import tpu as pltpu


def _round_up(x, m):
    return (x + m - 1) // m * m


# ----------------------------------------------------------------------------
# Pallas kernel: one (tm, Cpad) output tile of conv3x3+BN(+shortcut)(+ReLU).
# ----------------------------------------------------------------------------
def _conv_fold_kernel(*refs, taps, tm, load_rows, fold_xs, add_res, relu):
    if fold_xs or add_res:
        x_ref, w_ref, xs_ref, b_ref, o_ref = refs
    else:
        x_ref, w_ref, b_ref, o_ref = refs
        xs_ref = None

    m0 = pl.multiple_of(pl.program_id(1) * tm, tm)
    # One aligned dynamic-offset window per polyphase component; per-tap
    # shifts are static slices of that loaded window.  They feed ONE deep-K
    # matmul (a single re-layout) instead of 9 short-K matmuls + acc RMW.
    phases = sorted({p for p, _ in taps})
    windows = {p: x_ref[0, p, pl.ds(m0, load_rows), :] for p in phases}
    pieces = [windows[p][off:off + tm, :] for p, off in taps]
    if fold_xs:
        pieces.append(xs_ref[0])                     # 1x1 shortcut as extra K
    opnd = jnp.concatenate(pieces, axis=-1)          # (tm, Ktot) bf16
    acc = jnp.dot(opnd, w_ref[...], preferred_element_type=jnp.float32)

    out = acc + b_ref[...]
    if add_res:
        out = out + xs_ref[0]                        # identity residual, f32
    if relu:
        out = jnp.maximum(out, 0.0)
    o_ref[0] = out.astype(o_ref.dtype)


# ----------------------------------------------------------------------------
# Wrapper: polyphase layout + fused conv3x3/BN/shortcut/ReLU pallas_call
# ----------------------------------------------------------------------------
def _build_phases(x, stride, Hq, Wq):
    """Pad (conv pad=1) and polyphase-decompose so every filter tap is a
    contiguous window of a flattened (Hq*Wq) spatial axis, even at stride 2."""
    N, H, W, C = x.shape
    xp = jnp.pad(x, ((0, 0), (1, stride * Hq - H - 1),
                     (1, stride * Wq - W - 1), (0, 0)))
    ph = xp.reshape(N, Hq, stride, Wq, stride, C)
    ph = jnp.transpose(ph, (0, 2, 4, 1, 3, 5))       # (N, pr, pc, Hq, Wq, C)
    return ph.reshape(N, stride * stride, Hq * Wq, C)


def _flatten_ext(a, Wq, M_ext, M_pad, cpad, dtype):
    """(N, Ho, Wo, C) -> (N, M_pad, cpad or C) in the extended flat layout."""
    N, Ho, Wo, C = a.shape
    a = jnp.pad(a, ((0, 0), (0, 0), (0, Wq - Wo), (0, 0)))
    a = a.reshape(N, M_ext, C)
    cp = C if cpad is None else cpad
    a = jnp.pad(a, ((0, 0), (0, M_pad - M_ext), (0, cp - C)))
    return a.astype(dtype)


def conv3x3_bn(x, w_taps, bias, stride, *, relu=True, out_dtype=jnp.float32,
               shortcut_proj=None, residual=None, tm_max=256):
    """x: (N,H,W,Cin) NHWC; w_taps: (9,Cin,Cout) f32 with BN scale folded in
    (tap index = kh*3+kw); bias: (Cout,) f32.
    shortcut_proj: None or (xs (N,Ho,Wo,Cs), w_sc (Cs,Cout)) -- 1x1 projection
    folded into the deep-K matmul.  residual: None or (N,Ho,Wo,Cout) f32 --
    identity shortcut added elementwise in f32.  Returns (N,Ho,Wo,Cout)."""
    assert shortcut_proj is None or residual is None
    N, H, W, Cin = x.shape
    KK, _, Cout = w_taps.shape
    k = 3
    Ho = (H + 2 - k) // stride + 1
    Wo = (W + 2 - k) // stride + 1
    q = (k - 1) // stride                    # max per-phase tap offset per axis
    Hq, Wq = Ho + q, Wo + q                  # phase (= extended output) extent
    P = stride * stride                      # number of polyphase components

    # Extended-output tiling: compute at width Wq, discard the extra q columns
    # per row afterwards (they only ever read padding / discarded data).
    M_ext = Ho * Wq
    max_off = q * Wq + q
    ext = _round_up(max_off, 8)
    Cpad = _round_up(Cout, 128)              # lane-dense output width
    out_bytes = jnp.dtype(out_dtype).itemsize

    Cs = shortcut_proj[1].shape[0] if shortcut_proj is not None else 0
    Ktot = KK * Cin + Cs

    # --- Tile sizing / VMEM budgeting (v7x-safe). ---------------------------
    def _need(tm_):
        m_pad = _round_up(M_ext, tm_)
        blk = (P * (m_pad + ext) * Cin * 2   # resident input block (bf16)
               + Ktot * Cpad * 2             # stacked weights (bf16)
               + Cpad * 4                    # bias
               + tm_ * Cpad * out_bytes)     # output tile
        if shortcut_proj is not None:
            blk += tm_ * Cs * 2
        elif residual is not None:
            blk += tm_ * Cpad * 4
        work = (P * (tm_ + ext) * Cin * 2    # loaded windows
                + tm_ * Ktot * 2             # concatenated deep-K operand
                + 2 * tm_ * Cpad * 4)        # f32 matmul result / epilogue
        return 2 * blk + work                # x2: double-buffered pipeline

    tm = min(tm_max, _round_up(M_ext, 8))
    if N == 1 and M_ext > 8:
        # v7x has 2 TensorCores: keep at least 2 parallel grid steps.
        tm = min(tm, _round_up((M_ext + 1) // 2, 8))
    budget = 40 << 20
    while _need(tm) > budget and tm > 8:
        tm = max(8, _round_up(tm // 2, 8))
    # TODO(synk): if the batch-element-resident input block alone exceeds the
    # budget (very large feature maps), switch to an L-tiled (halo) input
    # BlockSpec instead of shrinking tm further.

    M_pad = _round_up(M_ext, tm)
    L_pad = M_pad + ext
    load_rows = tm + ext
    vmem_limit = int(min(max(2 * _need(tm), 16 << 20), 48 << 20))

    # --- Operands. ----------------------------------------------------------
    ph = _build_phases(x.astype(jnp.bfloat16), stride, Hq, Wq)
    ph = jnp.pad(ph, ((0, 0), (0, 0), (0, L_pad - Hq * Wq), (0, 0)))

    # Weights: (9,Cin,Cout) -> (9*Cin,Cout), shortcut rows appended, output
    # channels padded to lane-dense Cpad.  BN scale is already folded in.
    w_k = w_taps.reshape(KK * Cin, Cout)
    if shortcut_proj is not None:
        w_k = jnp.concatenate([w_k, shortcut_proj[1]], axis=0)
    w_p = jnp.pad(w_k, ((0, 0), (0, Cpad - Cout))).astype(jnp.bfloat16)
    b_p = jnp.pad(bias.astype(jnp.float32), (0, Cpad - Cout)).reshape(1, Cpad)

    taps = tuple(((kh % stride) * stride + (kw % stride),
                  (kh // stride) * Wq + (kw // stride))
                 for kh in range(k) for kw in range(k))

    in_specs = [
        # Whole (padded, flattened) input of one batch element stays resident
        # in VMEM across the M tiles (index constant in m).
        pl.BlockSpec((1, P, L_pad, Cin), lambda n, m: (n, 0, 0, 0)),
        # Weights: constant index_map -> fetched once, reused for all tiles.
        pl.BlockSpec((Ktot, Cpad), lambda n, m: (0, 0)),
    ]
    args = [ph, w_p]
    fold_xs = add_res = False

    if shortcut_proj is not None:
        xs = shortcut_proj[0]
        assert xs.shape[:3] == (N, Ho, Wo)
        xs_flat = _flatten_ext(xs, Wq, M_ext, M_pad, None, jnp.bfloat16)
        in_specs.append(pl.BlockSpec((1, tm, Cs), lambda n, m: (n, m, 0)))
        args.append(xs_flat)
        fold_xs = True
    elif residual is not None:
        assert residual.shape == (N, Ho, Wo, Cout)
        res_flat = _flatten_ext(residual.astype(jnp.float32), Wq, M_ext,
                                M_pad, Cpad, jnp.float32)
        in_specs.append(pl.BlockSpec((1, tm, Cpad), lambda n, m: (n, m, 0)))
        args.append(res_flat)
        add_res = True

    in_specs.append(pl.BlockSpec((1, Cpad), lambda n, m: (0, 0)))
    args.append(b_p)

    kernel = functools.partial(_conv_fold_kernel, taps=taps, tm=tm,
                               load_rows=load_rows, fold_xs=fold_xs,
                               add_res=add_res, relu=relu)

    out = pl.pallas_call(
        kernel,
        out_shape=jax.ShapeDtypeStruct((N, M_pad, Cpad), out_dtype),
        grid_spec=pltpu.PrefetchScalarGridSpec(
            num_scalar_prefetch=0,
            grid=(N, M_pad // tm),
            in_specs=in_specs,
            out_specs=pl.BlockSpec((1, tm, Cpad), lambda n, m: (n, m, 0)),
        ),
        compiler_params=pltpu.CompilerParams(
            dimension_semantics=("parallel", "parallel"),
            vmem_limit_bytes=vmem_limit,
        ),
    )(*args)

    # TODO(synk): for back-to-back convs the producer could mask its extended
    # columns in-kernel and write directly into the zero-padded flat layout
    # the stride-1 consumer reads, removing these XLA slice/pad HBM passes.
    out = out[:, :M_ext, :].reshape(N, Ho, Wq, Cpad)[:, :, :Wo, :Cout]
    return out


# ----------------------------------------------------------------------------
# Plain-JAX glue: weight reshaping, BN folding, BasicBlock forward
# ----------------------------------------------------------------------------
def conv_w_to_taps(w_oihw):
    # (O, I, kh, kw) -> (kh, kw, I, O) -> (kh*kw, I, O); tap index = kh*3 + kw.
    O, I, kh, kw = w_oihw.shape
    return jnp.transpose(w_oihw, (2, 3, 1, 0)).reshape(kh * kw, I, O)


def fold_bn(bn, eps=1e-5):
    gamma, beta, mean, var = bn
    scale = gamma / jnp.sqrt(var + eps)
    bias = beta - mean * scale
    return scale, bias


def basic_block_forward(x_nchw, params, stride):
    x = jnp.transpose(x_nchw, (0, 2, 3, 1)).astype(jnp.float32)   # NHWC
    N, H, W, in_planes = x.shape
    planes = params["conv1_w"].shape[0]

    # conv1 (3x3, stride) + bn1 + relu -- one fused kernel, bf16 intermediate.
    s1, b1 = fold_bn(params["bn1"])
    w1 = conv_w_to_taps(params["conv1_w"]) * s1            # fold BN scale
    out1 = conv3x3_bn(x, w1, b1, stride, relu=True, out_dtype=jnp.bfloat16)

    # conv2 (3x3, stride 1) + bn2 + shortcut-add + relu -- one fused kernel.
    s2, b2 = fold_bn(params["bn2"])
    w2 = conv_w_to_taps(params["conv2_w"]) * s2
    if stride != 1 or in_planes != planes:
        ss, bs = fold_bn(params["sc_bn"])
        w_sc = jnp.transpose(params["sc_w"][:, :, 0, 0]) * ss    # (Cin, planes)
        xs = x[:, ::stride, ::stride, :]
        out2 = conv3x3_bn(out1, w2, b2 + bs, 1, relu=True,
                          out_dtype=jnp.float32, shortcut_proj=(xs, w_sc))
    else:
        out2 = conv3x3_bn(out1, w2, b2, 1, relu=True, out_dtype=jnp.float32,
                          residual=x)                      # f32 elementwise add
    return jnp.transpose(out2, (0, 3, 1, 2))               # back to NCHW


# ----------------------------------------------------------------------------
# Pure-JAX reference (for correctness check)
# ----------------------------------------------------------------------------
def _ref_conv(x_nhwc, w_oihw, stride, pad):
    w_hwio = jnp.transpose(w_oihw, (2, 3, 1, 0))
    return jax.lax.conv_general_dilated(
        x_nhwc, w_hwio, window_strides=(stride, stride),
        padding=((pad, pad), (pad, pad)),
        dimension_numbers=("NHWC", "HWIO", "NHWC"))


def basic_block_reference(x_nchw, params, stride):
    x = jnp.transpose(x_nchw, (0, 2, 3, 1)).astype(jnp.float32)
    planes = params["conv1_w"].shape[0]
    s1, b1 = fold_bn(params["bn1"])
    out = jnp.maximum(_ref_conv(x, params["conv1_w"], stride, 1) * s1 + b1, 0.0)
    s2, b2 = fold_bn(params["bn2"])
    out = _ref_conv(out, params["conv2_w"], 1, 1) * s2 + b2
    if stride != 1 or x.shape[-1] != planes:
        ss, bs = fold_bn(params["sc_bn"])
        sc = _ref_conv(x, params["sc_w"], stride, 0) * ss + bs
    else:
        sc = x
    out = jnp.maximum(out + sc, 0.0)
    return jnp.transpose(out, (0, 3, 1, 2))


# ----------------------------------------------------------------------------
# Deterministic parameter init (shapes per nn.Module __init__)
# ----------------------------------------------------------------------------
def init_params(key, in_planes, planes, stride):
    ks = jax.random.split(key, 12)

    def bn_params(k):
        k1, k2, k3, k4 = jax.random.split(k, 4)
        gamma = jax.random.uniform(k1, (planes,), jnp.float32, 0.5, 1.5)
        beta = 0.1 * jax.random.normal(k2, (planes,), jnp.float32)
        mean = 0.1 * jax.random.normal(k3, (planes,), jnp.float32)
        var = jax.random.uniform(k4, (planes,), jnp.float32, 0.5, 1.5)
        return (gamma, beta, mean, var)

    params = {
        "conv1_w": 0.2 * jax.random.normal(ks[0], (planes, in_planes, 3, 3),
                                           jnp.float32),
        "bn1": bn_params(ks[1]),
        "conv2_w": 0.2 * jax.random.normal(ks[2], (planes, planes, 3, 3),
                                           jnp.float32),
        "bn2": bn_params(ks[3]),
    }
    if stride != 1 or in_planes != planes:
        params["sc_w"] = 0.2 * jax.random.normal(
            ks[4], (planes, in_planes, 1, 1), jnp.float32)
        params["sc_bn"] = bn_params(ks[5])
    return params


if __name__ == "__main__":
    key = jax.random.PRNGKey(0)
    k1, k2, k3, k4 = jax.random.split(key, 4)
    fwd = jax.jit(basic_block_forward, static_argnums=2)

    # bf16 matmuls (f32 accumulate) vs f32 reference -> loose tolerance.
    TOL = dict(rtol=5e-2, atol=5e-2)

    # Case 1: projection shortcut (stride 2, channel change).
    in_planes, planes, stride = 4, 8, 2
    x = jax.random.normal(k1, (2, in_planes, 16, 16), jnp.float32)   # NCHW
    params = init_params(k2, in_planes, planes, stride)
    out = jax.block_until_ready(fwd(x, params, stride))
    ref = jax.block_until_ready(basic_block_reference(x, params, stride))
    np.testing.assert_allclose(np.asarray(out), np.asarray(ref), **TOL)
    assert out.shape == (2, planes, 8, 8)

    # Case 2: identity shortcut (stride 1, same channels).
    x2 = jax.random.normal(k3, (2, 8, 16, 16), jnp.float32)
    params2 = init_params(k4, 8, 8, 1)
    out2 = jax.block_until_ready(fwd(x2, params2, 1))
    ref2 = jax.block_until_ready(basic_block_reference(x2, params2, 1))
    np.testing.assert_allclose(np.asarray(out2), np.asarray(ref2), **TOL)
    assert out2.shape == (2, 8, 16, 16)

    print("KERNEL_OK")
</pallas_src>

<mosaic_0001>
module attributes {stable_mosaic.version = 11 : i64} {
  func.func @_conv_fold_kernel(%arg0: i32, %arg1: i32, %arg2: memref<1x4x88x4xbf16, #tpu.memory_space<vmem>>, %arg3: memref<36x128xbf16, #tpu.memory_space<vmem>>, %arg4: memref<1x128xf32, #tpu.memory_space<vmem>>, %arg5: memref<1x72x128xbf16, #tpu.memory_space<vmem>>) attributes {dimension_semantics = [#tpu.dimension_semantics<parallel>, #tpu.dimension_semantics<parallel>], iteration_bounds = array<i64: 2, 1>, scalar_prefetch = 0 : i64, scratch_operands = 0 : i64, tpu.core_type = #tpu.core_type<tc>, window_params = [{transform_indices = @transform_0, window_bounds = array<i64: 1, 4, 88, 4>}, {pipeline_mode = #tpu.pipeline_mode<synchronous>, transform_indices = @transform_1, window_bounds = array<i64: 36, 128>}, {pipeline_mode = #tpu.pipeline_mode<synchronous>, transform_indices = @transform_2, window_bounds = array<i64: 1, 128>}, {transform_indices = @transform_3, window_bounds = array<i64: 1, 72, 128>}]} {
    %c72_i32 = arith.constant 72 : i32
    %0 = arith.muli %arg1, %c72_i32 : i32
    %1 = tpu.assume_multiple %0, 72 : i32
    %c0 = arith.constant 0 : index
    %c0_0 = arith.constant 0 : index
    %2 = arith.index_cast %1 : i32 to index
    %c0_1 = arith.constant 0 : index
    %3 = vector.load %arg2[%c0, %c0_0, %2, %c0_1] : memref<1x4x88x4xbf16, #tpu.memory_space<vmem>>, vector<1x1x88x4xbf16>
    %4 = vector.shape_cast %3 : vector<1x1x88x4xbf16> to vector<88x4xbf16>
    %c0_2 = arith.constant 0 : index
    %c1 = arith.constant 1 : index
    %5 = arith.index_cast %1 : i32 to index
    %c0_3 = arith.constant 0 : index
    %6 = vector.load %arg2[%c0_2, %c1, %5, %c0_3] : memref<1x4x88x4xbf16, #tpu.memory_space<vmem>>, vector<1x1x88x4xbf16>
    %7 = vector.shape_cast %6 : vector<1x1x88x4xbf16> to vector<88x4xbf16>
    %c0_4 = arith.constant 0 : index
    %c2 = arith.constant 2 : index
    %8 = arith.index_cast %1 : i32 to index
    %c0_5 = arith.constant 0 : index
    %9 = vector.load %arg2[%c0_4, %c2, %8, %c0_5] : memref<1x4x88x4xbf16, #tpu.memory_space<vmem>>, vector<1x1x88x4xbf16>
    %10 = vector.shape_cast %9 : vector<1x1x88x4xbf16> to vector<88x4xbf16>
    %c0_6 = arith.constant 0 : index
    %c3 = arith.constant 3 : index
    %11 = arith.index_cast %1 : i32 to index
    %c0_7 = arith.constant 0 : index
    %12 = vector.load %arg2[%c0_6, %c3, %11, %c0_7] : memref<1x4x88x4xbf16, #tpu.memory_space<vmem>>, vector<1x1x88x4xbf16>
    %13 = vector.shape_cast %12 : vector<1x1x88x4xbf16> to vector<88x4xbf16>
    %14 = vector.extract_strided_slice %4 {offsets = [0, 0], sizes = [72, 4], strides = [1, 1]} : vector<88x4xbf16> to vector<72x4xbf16>
    %15 = vector.extract_strided_slice %7 {offsets = [0, 0], sizes = [72, 4], strides = [1, 1]} : vector<88x4xbf16> to vector<72x4xbf16>
    %16 = vector.extract_strided_slice %4 {offsets = [1, 0], sizes = [72, 4], strides = [1, 1]} : vector<88x4xbf16> to vector<72x4xbf16>
    %17 = vector.extract_strided_slice %10 {offsets = [0, 0], sizes = [72, 4], strides = [1, 1]} : vector<88x4xbf16> to vector<72x4xbf16>
    %18 = vector.extract_strided_slice %13 {offsets = [0, 0], sizes = [72, 4], strides = [1, 1]} : vector<88x4xbf16> to vector<72x4xbf16>
    %19 = vector.extract_strided_slice %10 {offsets = [1, 0], sizes = [72, 4], strides = [1, 1]} : vector<88x4xbf16> to vector<72x4xbf16>
    %20 = vector.extract_strided_slice %4 {offsets = [9, 0], sizes = [72, 4], strides = [1, 1]} : vector<88x4xbf16> to vector<72x4xbf16>
    %21 = vector.extract_strided_slice %7 {offsets = [9, 0], sizes = [72, 4], strides = [1, 1]} : vector<88x4xbf16> to vector<72x4xbf16>
    %22 = vector.extract_strided_slice %4 {offsets = [10, 0], sizes = [72, 4], strides = [1, 1]} : vector<88x4xbf16> to vector<72x4xbf16>
    %23 = tpu.concatenate %14, %15, %16, %17, %18, %19, %20, %21, %22 in 1 : vector<72x4xbf16>, vector<72x4xbf16>, vector<72x4xbf16>, vector<72x4xbf16>, vector<72x4xbf16>, vector<72x4xbf16>, vector<72x4xbf16>, vector<72x4xbf16>, vector<72x4xbf16> -> vector<72x36xbf16>
    %c0_8 = arith.constant 0 : index
    %c0_9 = arith.constant 0 : index
    %24 = vector.load %arg3[%c0_8, %c0_9] : memref<36x128xbf16, #tpu.memory_space<vmem>>, vector<36x128xbf16>
    %cst = arith.constant dense<0.000000e+00> : vector<72x128xf32>
    %25 = tpu.matmul %23, %24, %cst {dimension_numbers = #tpu.dot_dimension_numbers<[1], [0], [0], [1], [0, 0, 1, 1], [], []>} : vector<72x36xbf16>, vector<36x128xbf16>, vector<72x128xf32> -> vector<72x128xf32>
    %c0_10 = arith.constant 0 : index
    %c0_11 = arith.constant 0 : index
    %26 = vector.load %arg4[%c0_10, %c0_11] : memref<1x128xf32, #tpu.memory_space<vmem>>, vector<1x128xf32>
    %27 = vector.broadcast %26 : vector<1x128xf32> to vector<72x128xf32>
    %28 = arith.addf %25, %27 : vector<72x128xf32>
    %cst_12 = arith.constant 0.000000e+00 : f32
    %29 = vector.broadcast %cst_12 : f32 to vector<72x128xf32>
    %30 = arith.maximumf %28, %29 : vector<72x128xf32>
    %31 = arith.truncf %30 : vector<72x128xf32> to vector<72x128xbf16>
    %c0_13 = arith.constant 0 : index
    %c0_14 = arith.constant 0 : index
    %c0_15 = arith.constant 0 : index
    %32 = vector.load %arg5[%c0_13, %c0_14, %c0_15] : memref<1x72x128xbf16, #tpu.memory_space<vmem>>, vector<1x72x128xbf16>
    %33 = vector.shape_cast %32 : vector<1x72x128xbf16> to vector<72x128xbf16>
    %34 = vector.shape_cast %31 : vector<72x128xbf16> to vector<1x72x128xbf16>
    tpu.vector_store %arg5[%c0_13, %c0_14, %c0_15], %34 {strides = array<i32>} : memref<1x72x128xbf16, #tpu.memory_space<vmem>>, vector<1x72x128xbf16>,
    return
  }
  func.func @transform_0(%arg0: i32, %arg1: i32) -> (i32, i32, i32, i32) {
    %c0_i32 = arith.constant 0 : i32
    %c0_i32_0 = arith.constant 0 : i32
    %c0_i32_1 = arith.constant 0 : i32
    %c0_i32_2 = arith.constant 0 : i32
    return %arg0, %c0_i32, %c0_i32_0, %c0_i32_1 : i32, i32, i32, i32
  }
  func.func @transform_1(%arg0: i32, %arg1: i32) -> (i32, i32) {
    %c0_i32 = arith.constant 0 : i32
    %c0_i32_0 = arith.constant 0 : i32
    %c0_i32_1 = arith.constant 0 : i32
    return %c0_i32, %c0_i32_0 : i32, i32
  }
  func.func @transform_2(%arg0: i32, %arg1: i32) -> (i32, i32) {
    %c0_i32 = arith.constant 0 : i32
    %c0_i32_0 = arith.constant 0 : i32
    %c0_i32_1 = arith.constant 0 : i32
    return %c0_i32, %c0_i32_0 : i32, i32
  }
  func.func @transform_3(%arg0: i32, %arg1: i32) -> (i32, i32, i32) {
    %c0_i32 = arith.constant 0 : i32
    %c0_i32_0 = arith.constant 0 : i32
    return %arg0, %arg1, %c0_i32 : i32, i32, i32
  }
}

module attributes {stable_mosaic.version = 11 : i64} {
  func.func @_conv_fold_kernel(%arg0: i32, %arg1: i32, %arg2: memref<1x1x104x8xbf16, #tpu.memory_space<vmem>>, %arg3: memref<76x128xbf16, #tpu.memory_space<vmem>>, %arg4: memref<1x80x4xbf16, #tpu.memory_space<vmem>>, %arg5: memref<1x128xf32, #tpu.memory_space<vmem>>, %arg6: memref<1x80x128xf32, #tpu.memory_space<vmem>>) attributes {dimension_semantics = [#tpu.dimension_semantics<parallel>, #tpu.dimension_semantics<parallel>], iteration_bounds = array<i64: 2, 1>, scalar_prefetch = 0 : i64, scratch_operands = 0 : i64, tpu.core_type = #tpu.core_type<tc>, window_params = [{transform_indices = @transform_0, window_bounds = array<i64: 1, 1, 104, 8>}, {pipeline_mode = #tpu.pipeline_mode<synchronous>, transform_indices = @transform_1, window_bounds = array<i64: 76, 128>}, {transform_indices = @transform_2, window_bounds = array<i64: 1, 80, 4>}, {pipeline_mode = #tpu.pipeline_mode<synchronous>, transform_indices = @transform_3, window_bounds = array<i64: 1, 128>}, {transform_indices = @transform_4, window_bounds = array<i64: 1, 80, 128>}]} {
    %c80_i32 = arith.constant 80 : i32
    %0 = arith.muli %arg1, %c80_i32 : i32
    %1 = tpu.assume_multiple %0, 80 : i32
    %c0 = arith.constant 0 : index
    %c0_0 = arith.constant 0 : index
    %2 = arith.index_cast %1 : i32 to index
    %c0_1 = arith.constant 0 : index
    %3 = vector.load %arg2[%c0, %c0_0, %2, %c0_1] : memref<1x1x104x8xbf16, #tpu.memory_space<vmem>>, vector<1x1x104x8xbf16>
    %4 = vector.shape_cast %3 : vector<1x1x104x8xbf16> to vector<104x8xbf16>
    %5 = vector.extract_strided_slice %4 {offsets = [0, 0], sizes = [80, 8], strides = [1, 1]} : vector<104x8xbf16> to vector<80x8xbf16>
    %6 = vector.extract_strided_slice %4 {offsets = [1, 0], sizes = [80, 8], strides = [1, 1]} : vector<104x8xbf16> to vector<80x8xbf16>
    %7 = vector.extract_strided_slice %4 {offsets = [2, 0], sizes = [80, 8], strides = [1, 1]} : vector<104x8xbf16> to vector<80x8xbf16>
    %8 = vector.extract_strided_slice %4 {offsets = [10, 0], sizes = [80, 8], strides = [1, 1]} : vector<104x8xbf16> to vector<80x8xbf16>
    %9 = vector.extract_strided_slice %4 {offsets = [11, 0], sizes = [80, 8], strides = [1, 1]} : vector<104x8xbf16> to vector<80x8xbf16>
    %10 = vector.extract_strided_slice %4 {offsets = [12, 0], sizes = [80, 8], strides = [1, 1]} : vector<104x8xbf16> to vector<80x8xbf16>
    %11 = vector.extract_strided_slice %4 {offsets = [20, 0], sizes = [80, 8], strides = [1, 1]} : vector<104x8xbf16> to vector<80x8xbf16>
    %12 = vector.extract_strided_slice %4 {offsets = [21, 0], sizes = [80, 8], strides = [1, 1]} : vector<104x8xbf16> to vector<80x8xbf16>
    %13 = vector.extract_strided_slice %4 {offsets = [22, 0], sizes = [80, 8], strides = [1, 1]} : vector<104x8xbf16> to vector<80x8xbf16>
    %c0_2 = arith.constant 0 : index
    %c0_3 = arith.constant 0 : index
    %c0_4 = arith.constant 0 : index
    %14 = vector.load %arg4[%c0_2, %c0_3, %c0_4] : memref<1x80x4xbf16, #tpu.memory_space<vmem>>, vector<1x80x4xbf16>
    %15 = vector.shape_cast %14 : vector<1x80x4xbf16> to vector<80x4xbf16>
    %16 = tpu.concatenate %5, %6, %7, %8, %9, %10, %11, %12, %13, %15 in 1 : vector<80x8xbf16>, vector<80x8xbf16>, vector<80x8xbf16>, vector<80x8xbf16>, vector<80x8xbf16>, vector<80x8xbf16>, vector<80x8xbf16>, vector<80x8xbf16>, vector<80x8xbf16>, vector<80x4xbf16> -> vector<80x76xbf16>
    %c0_5 = arith.constant 0 : index
    %c0_6 = arith.constant 0 : index
    %17 = vector.load %arg3[%c0_5, %c0_6] : memref<76x128xbf16, #tpu.memory_space<vmem>>, vector<76x128xbf16>
    %cst = arith.constant dense<0.000000e+00> : vector<80x128xf32>
    %18 = tpu.matmul %16, %17, %cst {dimension_numbers = #tpu.dot_dimension_numbers<[1], [0], [0], [1], [0, 0, 1, 1], [], []>} : vector<80x76xbf16>, vector<76x128xbf16>, vector<80x128xf32> -> vector<80x128xf32>
    %c0_7 = arith.constant 0 : index
    %c0_8 = arith.constant 0 : index
    %19 = vector.load %arg5[%c0_7, %c0_8] : memref<1x128xf32, #tpu.memory_space<vmem>>, vector<1x128xf32>
    %20 = vector.broadcast %19 : vector<1x128xf32> to vector<80x128xf32>
    %21 = arith.addf %18, %20 : vector<80x128xf32>
    %cst_9 = arith.constant 0.000000e+00 : f32
    %22 = vector.broadcast %cst_9 : f32 to vector<80x128xf32>
    %23 = arith.maximumf %21, %22 : vector<80x128xf32>
    %c0_10 = arith.constant 0 : index
    %c0_11 = arith.constant 0 : index
    %c0_12 = arith.constant 0 : index
    %24 = vector.load %arg6[%c0_10, %c0_11, %c0_12] : memref<1x80x128xf32, #tpu.memory_space<vmem>>, vector<1x80x128xf32>
    %25 = vector.shape_cast %24 : vector<1x80x128xf32> to vector<80x128xf32>
    %26 = vector.shape_cast %23 : vector<80x128xf32> to vector<1x80x128xf32>
    tpu.vector_store %arg6[%c0_10, %c0_11, %c0_12], %26 {strides = array<i32>} : memref<1x80x128xf32, #tpu.memory_space<vmem>>, vector<1x80x128xf32>,
    return
  }
  func.func @transform_0(%arg0: i32, %arg1: i32) -> (i32, i32, i32, i32) {
    %c0_i32 = arith.constant 0 : i32
    %c0_i32_0 = arith.constant 0 : i32
    %c0_i32_1 = arith.constant 0 : i32
    %c0_i32_2 = arith.constant 0 : i32
    return %arg0, %c0_i32, %c0_i32_0, %c0_i32_1 : i32, i32, i32, i32
  }
  func.func @transform_1(%arg0: i32, %arg1: i32) -> (i32, i32) {
    %c0_i32 = arith.constant 0 : i32
    %c0_i32_0 = arith.constant 0 : i32
    %c0_i32_1 = arith.constant 0 : i32
    return %c0_i32, %c0_i32_0 : i32, i32
  }
  func.func @transform_2(%arg0: i32, %arg1: i32) -> (i32, i32, i32) {
    %c0_i32 = arith.constant 0 : i32
    %c0_i32_0 = arith.constant 0 : i32
    return %arg0, %arg1, %c0_i32 : i32, i32, i32
  }
  func.func @transform_3(%arg0: i32, %arg1: i32) -> (i32, i32) {
    %c0_i32 = arith.constant 0 : i32
    %c0_i32_0 = arith.constant 0 : i32
    %c0_i32_1 = arith.constant 0 : i32
    return %c0_i32, %c0_i32_0 : i32, i32
  }
  func.func @transform_4(%arg0: i32, %arg1: i32) -> (i32, i32, i32) {
    %c0_i32 = arith.constant 0 : i32
    %c0_i32_0 = arith.constant 0 : i32
    return %arg0, %arg1, %c0_i32 : i32, i32, i32
  }
}

</mosaic_0001>

<llo_original>
// kernel: basic_block_forward.2
$region0: #{basic_block_forward.2}
  #allocation0 [shape = 'u32[]', space=smem, size = 0x4, offset = 0x4, fixed_abs, tag = 'smem constant byte address 0x4 - core index']
  #allocation1 [shape = 'u32[144,128]{1,0:T(1,128)}', space=vmem, size = 0x12000, scoped, tag = 'internal scratch']
  %s0 = inlined_call_operand.vmem [shape: bf16[2,4,88,4], index: 0, kind: input, shape index: {}]
  %s1 = inlined_call_operand.vmem [shape: bf16[36,128], index: 1, kind: input, shape index: {}]
  %s2 = inlined_call_operand.vmem [shape: f32[1,128], index: 2, kind: input, shape index: {}]
  %s3 = inlined_call_operand.vmem [shape: bf16[2,72,128], index: 3, kind: output, shape index: {}]
  %s4 = sld [smem:[#allocation0]]
  $region45: #{basic_block_forward.2} parent=0
    _
  %s6 = ssub.s32 1, %s4
  %s7 = scalar_select 0, %s6, %s4
  loop: start=0, step=1, limit=4
  $region2: #{basic_block_forward.2} parent=0 // loop_pre_header
    _
  $region3: #{basic_block_forward.2} parent=0 // loop_header
    %s9 = sphi 0, %s13
    %p10 = scmp.ge.s32.totalorder %s9, 4
    %s16 = sphi 0, %s28
    %s17 = sphi 0, %s24
    %s18 = sphi 0, %s16
    %s19 = sphi 0, %s17
    %s20 = sphi 0, %s18
    %s21 = sphi 0, %s19
    %s31 = sphi 0, %s33
    %s34 = sphi 0, %s31
    %s35 = sphi 0, %s34
    %s51 = sphi 0, %s35
    %s55 = sphi 0, %s55
    %s57 = sphi 0, %s55
    %s58 = sphi 0, %s57
    %s72 = sphi 0, %s58
    %s76 = sphi 0, %s76
    %s78 = sphi 0, %s76
    %s79 = sphi 0, %s78
    %s93 = sphi 0, %s79
    %s101 = sphi 0, %s103
    %s104 = sphi 0, %s101
    %s105 = sphi 0, %s104
    %s121 = sphi 0, %s105
  $region4: #{basic_block_forward.2} parent=0 // loop_header_branch
    %12 = sbr.rel (%p10) target = $region8
  $region5: #{basic_block_forward.2} parent=0 // loop_body
    %s14 = ssub.s32 %s9, 1
    %s15 = ssub.s32 %s9, 2
    %s22 = sadd.s32 1, %s17
    %p23 = scmp.ge.s32.totalorder %s22, 1
    %s24 = scalar_select %p23, 0, %s22
    %s25 = sadd.s32 1, %s16
    %s26 = scalar_select %p23, %s25, %s16
    %p27 = scmp.ge.s32.totalorder %s26, 2
    %s28 = scalar_select %p27, 0, %s26
    %s29 = ssub.s32 %s16, %s28
    %p30 = scmp.eq.s32.totalorder %s29, 0
    %s32 = sadd.s32 %s31, 1
    %s33 = scalar_select %p30, %s31, %s32
    %p36 = pneg %p30
    %p37 = scmp.eq.s32.totalorder %s9, 1
    %p38 = por %p36, %p37
    %p39 = scmp.ne.s32.totalorder %s31, %s34
    %p40 = scmp.eq.s32.totalorder %s9, 0
    %p41 = por %p39, %p40
    %p42 = scmp.ne.s32.totalorder %s31, %s34
    %p43 = scmp.eq.s32.totalorder %s14, 1
    %p44 = por %p42, %p43
    %p45 = scmp.ne.s32.totalorder %s34, %s35
    %p46 = scmp.eq.s32.totalorder %s14, 0
    %p47 = por %p45, %p46
    %p48 = scmp.ne.s32.totalorder %s34, %s35
    %p49 = scmp.eq.s32.totalorder %s15, 1
    %p50 = por %p48, %p49
    %p52 = scmp.ne.s32.totalorder %s35, %s51
    %p53 = scmp.eq.s32.totalorder %s15, 0
    %p54 = por %p52, %p53
    %s56 = sadd.s32 %s55, 1
    %p59 = scmp.eq.s32.totalorder %s9, 1
    %p60 = scmp.ne.s32.totalorder %s55, %s57
    %p61 = scmp.eq.s32.totalorder %s9, 0
    %p62 = por %p60, %p61
    %p63 = scmp.ne.s32.totalorder %s55, %s57
    %p64 = scmp.eq.s32.totalorder %s14, 1
    %p65 = por %p63, %p64
    %p66 = scmp.ne.s32.totalorder %s57, %s58
    %p67 = scmp.eq.s32.totalorder %s14, 0
    %p68 = por %p66, %p67
    %p69 = scmp.ne.s32.totalorder %s57, %s58
    %p70 = scmp.eq.s32.totalorder %s15, 1
    %p71 = por %p69, %p70
    %p73 = scmp.ne.s32.totalorder %s58, %s72
    %p74 = scmp.eq.s32.totalorder %s15, 0
    %p75 = por %p73, %p74
    %s77 = sadd.s32 %s76, 1
    %p80 = scmp.eq.s32.totalorder %s9, 1
    %p81 = scmp.ne.s32.totalorder %s76, %s78
    %p82 = scmp.eq.s32.totalorder %s9, 0
    %p83 = por %p81, %p82
    %p84 = scmp.ne.s32.totalorder %s76, %s78
    %p85 = scmp.eq.s32.totalorder %s14, 1
    %p86 = por %p84, %p85
    %p87 = scmp.ne.s32.totalorder %s78, %s79
    %p88 = scmp.eq.s32.totalorder %s14, 0
    %p89 = por %p87, %p88
    %p90 = scmp.ne.s32.totalorder %s78, %s79
    %p91 = scmp.eq.s32.totalorder %s15, 1
    %p92 = por %p90, %p91
    %p94 = scmp.ne.s32.totalorder %s79, %s93
    %p95 = scmp.eq.s32.totalorder %s15, 0
    %p96 = por %p94, %p95
    %s97 = ssub.s32 %s16, %s28
    %s98 = ssub.s32 %s17, %s24
    %s99 = sor.u32 %s97, %s98
    %p100 = scmp.eq.s32.totalorder %s99, 0
    %s102 = sadd.s32 %s101, 1
    %s103 = scalar_select %p100, %s101, %s102
    %p106 = pneg %p100
    %p107 = scmp.eq.s32.totalorder %s9, 1
    %p108 = por %p106, %p107
    %p109 = scmp.ne.s32.totalorder %s101, %s104
    %p110 = scmp.eq.s32.totalorder %s9, 0
    %p111 = por %p109, %p110
    %p112 = scmp.ne.s32.totalorder %s101, %s104
    %p113 = scmp.eq.s32.totalorder %s14, 1
    %p114 = por %p112, %p113
    %p115 = scmp.ne.s32.totalorder %s104, %s105
    %p116 = scmp.eq.s32.totalorder %s14, 0
    %p117 = por %p115, %p116
    %p118 = scmp.ne.s32.totalorder %s104, %s105
    %p119 = scmp.eq.s32.totalorder %s15, 1
    %p120 = por %p118, %p119
    %p122 = scmp.ne.s32.totalorder %s105, %s121
    %p123 = scmp.eq.s32.totalorder %s15, 0
    %p124 = por %p122, %p123
    %p125 = scmp.le.s32.totalorder 1, %s9
    %p126 = scmp.lt.s32.totalorder %s9, 3
    %p127 = pnand %p125, %p126
    %p128 = pneg %p127
    // Predicated region
    $region9: #{basic_block_forward.2} parent=5 // pred_check
      _
    $region10: #{basic_block_forward.2} parent=5 // pred_check_branch
      %130 = sbr.rel (%p127) target = $region12
    $region11: #{basic_block_forward.2} parent=5 // pred_region
      %s131 = ssub.s32 %s9, 1
      // Predicated region
      $region13: #{basic_block_forward.2} parent=11 // pred_check
        %p132 = pneg %p68
      $region14: #{basic_block_forward.2} parent=11 // pred_check_branch
        %134 = sbr.rel (%p132) target = $region16
      $region15: #{basic_block_forward.2} parent=11 // pred_region
        _
      $region16: #{basic_block_forward.2} parent=11 // pred_fallthru
        _
      // Predicated region
      $region17: #{basic_block_forward.2} parent=11 // pred_check
        %p135 = pneg %p89
      $region18: #{basic_block_forward.2} parent=11 // pred_check_branch
        %137 = sbr.rel (%p135) target = $region20
      $region19: #{basic_block_forward.2} parent=11 // pred_region
        _
      $region20: #{basic_block_forward.2} parent=11 // pred_fallthru
        _
    $region12: #{basic_block_forward.2} parent=5 // pred_fallthru
      _
    %p138 = scmp.lt.s32.totalorder %s9, 2
    // Predicated region
    $region21: #{basic_block_forward.2} parent=5 // pred_check
      %p139 = pneg %p138
    $region22: #{basic_block_forward.2} parent=5 // pred_check_branch
      %141 = sbr.rel (%p139) target = $region24
    $region23: #{basic_block_forward.2} parent=5 // pred_region
      // Predicated region
      $region25: #{basic_block_forward.2} parent=23 // pred_check
        %p142 = pneg %p41
      $region26: #{basic_block_forward.2} parent=23 // pred_check_branch
        %144 = sbr.rel (%p142) target = $region28
      $region27: #{basic_block_forward.2} parent=23 // pred_region
        %p145 = scmp.lt.s32.totalorder %s16, 1
        %s146 = scalar_select %p145, %s16, 1
        %s147 = smul.addr %s146, 44
        %s148 = smul.addr %s147, 4
        %s149 = scalar_lea.vmem %s0, %s148
      $region28: #{basic_block_forward.2} parent=23 // pred_fallthru
        _
    $region24: #{basic_block_forward.2} parent=5 // pred_fallthru
      _
    %p150 = scmp.le.s32.totalorder 1, %s9
    %p151 = scmp.lt.s32.totalorder %s9, 3
    %p152 = pnand %p150, %p151
    %p153 = pneg %p152
    // Predicated region
    $region29: #{basic_block_forward.2} parent=5 // pred_check
      _
    $region30: #{basic_block_forward.2} parent=5 // pred_check_branch
      %155 = sbr.rel (%p152) target = $region32
    $region31: #{basic_block_forward.2} parent=5 // pred_region
      %s156 = ssub.s32 %s9, 1
      %p157 = scmp.lt.s32.totalorder %s18, 1
      %s158 = scalar_select %p157, %s18, 1
      %s159 = smul.addr %s158, 44
      %s160 = smul.addr %s159, 4
      %s161 = scalar_lea.vmem %s0, %s160
      %p162 = pneg %p47
      %p163 = pneg %p44
      %p164 = pneg %p68
      %p165 = pneg %p65
      %p166 = pneg %p89
      %p167 = pneg %p86
      %p168 = pneg %p117
      %p169 = pneg %p114
      %s170 = smul.u32 9, %s19
      %p171 = scmp.lt.s32.totalorder %s18, 1
      %s172 = scalar_select %p171, %s18, 1
      %p173 = scmp.lt.s32.totalorder %s170, 8
      %s174 = scalar_select %p173, %s170, 8
      %s175 = smul.addr %s172, 9
      %s176 = sadd.s32 %s174, %s175
      %s177 = smul.addr %s176, 4
      %s178 = scalar_lea.vmem %s3, %s177
      %p179 = scmp.lt.s32.totalorder %s18, 1
      %s180 = scalar_select %p179, %s18, 1
      %s181 = smul.addr %s180, 44
      %s182 = smul.addr %s181, 4
      %s183 = scalar_lea.vmem %s0, %s182
      %s184 = smul.u32 9, %s19
      %p185 = scmp.lt.s32.totalorder %s18, 1
      %s186 = scalar_select %p185, %s18, 1
      %p187 = scmp.lt.s32.totalorder %s184, 8
      %s188 = scalar_select %p187, %s184, 8
      %s189 = smul.addr %s186, 9
      %s190 = sadd.s32 %s188, %s189
      %s191 = smul.addr %s190, 4
      %s192 = scalar_lea.vmem %s3, %s191
      %s193 = smul.u32 9, %s19
      %s195 = smul.u32 %s19, 72
      %s196 = sshra.s32 %s195, 3
      %s197 = sand.u32 %s195, 7
      %s198 = smul.addr %s196, 4
      %s199 = scalar_lea.vmem %s183, %s198
      %v200 = vld [vmem:[%s199] sm:$0xf]
      %v201 = vld [vmem:[%s199 + $0x4] sm:$0xf]
      %v202 = vld [vmem:[%s199 + $0x8] sm:$0xf]
      %v203 = vld [vmem:[%s199 + $0xc] sm:$0xf]
      %v204 = vld [vmem:[%s199 + $0x10] sm:$0xf]
      %v205 = vld [vmem:[%s199 + $0x14] sm:$0xf]
      %v206 = vld [vmem:[%s199 + $0x18] sm:$0xf]
      %v207 = vld [vmem:[%s199 + $0x1c] sm:$0xf]
      %v208 = vld [vmem:[%s199 + $0x20] sm:$0xf]
      %v209 = vld [vmem:[%s199 + $0x24] sm:$0xf]
      %v210 = vld [vmem:[%s199 + $0x28] sm:$0xf]
      %s211 = sadd.s32 %s196, 11
      %s212 = smul.addr %s211, 4
      %s213 = scalar_lea.vmem %s183, %s212
      %v214 = vld [vmem:[%s213] sm:$0xf]
      %v215 = vld [vmem:[%s213 + $0x4] sm:$0xf]
      %v216 = vld [vmem:[%s213 + $0x8] sm:$0xf]
      %v217 = vld [vmem:[%s213 + $0xc] sm:$0xf]
      %v218 = vld [vmem:[%s213 + $0x10] sm:$0xf]
      %v219 = vld [vmem:[%s213 + $0x14] sm:$0xf]
      %v220 = vld [vmem:[%s213 + $0x18] sm:$0xf]
      %v221 = vld [vmem:[%s213 + $0x1c] sm:$0xf]
      %v222 = vld [vmem:[%s213 + $0x20] sm:$0xf]
      %v223 = vld [vmem:[%s213 + $0x24] sm:$0xf]
      %v224 = vld [vmem:[%s213 + $0x28] sm:$0xf]
      %s225 = sadd.s32 %s196, 22
      %s226 = smul.addr %s225, 4
      %s227 = scalar_lea.vmem %s183, %s226
      %v228 = vld [vmem:[%s227] sm:$0xf]
      %v229 = vld [vmem:[%s227 + $0x4] sm:$0xf]
      %v230 = vld [vmem:[%s227 + $0x8] sm:$0xf]
      %v231 = vld [vmem:[%s227 + $0xc] sm:$0xf]
      %v232 = vld [vmem:[%s227 + $0x10] sm:$0xf]
      %v233 = vld [vmem:[%s227 + $0x14] sm:$0xf]
      %v234 = vld [vmem:[%s227 + $0x18] sm:$0xf]
      %v235 = vld [vmem:[%s227 + $0x1c] sm:$0xf]
      %v236 = vld [vmem:[%s227 + $0x20] sm:$0xf]
      %v237 = vld [vmem:[%s227 + $0x24] sm:$0xf]
      %s238 = sadd.s32 %s196, 33
      %s239 = smul.addr %s238, 4
      %s240 = scalar_lea.vmem %s183, %s239
      %v241 = vld [vmem:[%s240] sm:$0xf]
      %v242 = vld [vmem:[%s240 + $0x4] sm:$0xf]
      %v243 = vld [vmem:[%s240 + $0x8] sm:$0xf]
      %v244 = vld [vmem:[%s240 + $0xc] sm:$0xf]
      %v245 = vld [vmem:[%s240 + $0x10] sm:$0xf]
      %v246 = vld [vmem:[%s240 + $0x14] sm:$0xf]
      %v247 = vld [vmem:[%s240 + $0x18] sm:$0xf]
      %v248 = vld [vmem:[%s240 + $0x1c] sm:$0xf]
      %v249 = vld [vmem:[%s240 + $0x20] sm:$0xf]
      %v259 = vunpack.c.l.b16 %v200
      %v260 = vunpack.c.l.b16 %v201
      %v261 = vunpack.c.l.b16 %v202
      %v262 = vunpack.c.l.b16 %v203
      %v263 = vunpack.c.l.b16 %v204
      %v264 = vunpack.c.l.b16 %v205
      %v265 = vunpack.c.l.b16 %v206
      %v266 = vunpack.c.l.b16 %v207
      %v267 = vunpack.c.l.b16 %v208
      %v268 = vpack.c.b16 %v260, %v259
      %v269 = vpack.c.b16 %v262, %v261
      %v270 = vpack.c.b16 %v264, %v263
      %v271 = vpack.c.b16 %v266, %v265
      %v272 = vpack.c.b16 %v267, %v267
      %v282 = vunpack.c.l.b16 %v214
      %v283 = vunpack.c.l.b16 %v215
      %v284 = vunpack.c.l.b16 %v216
      %v285 = vunpack.c.l.b16 %v217
      %v286 = vunpack.c.l.b16 %v218
      %v287 = vunpack.c.l.b16 %v219
      %v288 = vunpack.c.l.b16 %v220
      %v289 = vunpack.c.l.b16 %v221
      %v290 = vunpack.c.l.b16 %v222
      %v291 = vpack.c.b16 %v283, %v282
      %v292 = vpack.c.b16 %v285, %v284
      %v293 = vpack.c.b16 %v287, %v286
      %v294 = vpack.c.b16 %v289, %v288
      %v295 = vpack.c.b16 %v290, %v290
      %296 = vrot.lane.b32.xlu0 %v291, 4
      %v297 = vpop.permute.xlu0 %296
      %298 = vrot.lane.b32.xlu0 %v292, 4
      %v299 = vpop.permute.xlu0 %298
      %300 = vrot.lane.b32.xlu0 %v293, 4
      %v301 = vpop.permute.xlu0 %300
      %302 = vrot.lane.b32.xlu0 %v294, 4
      %v303 = vpop.permute.xlu0 %302
      %304 = vrot.lane.b32.xlu0 %v295, 4
      %v305 = vpop.permute.xlu0 %304
      %v307 = vunpack.c.l.b16 %v209
      %v308 = vpack.c.b16 %v307, %v267
      %vm309 = vsmask.f32 7424
      %v311 = vshrl.u32 %v268, 16
      %v313 = vshll.u32 %v268, 16
      %v315 = vrot.slane %v313, 1
      %v316 = vor.u32 %v311, %v315
      %v318 = vshll.u32 %v269, 16
      %v320 = vrot.slane %v318, 1
      %v321 = vsel %vm309, %v316, %v320
      %v322 = vshrl.u32 %v269, 16
      %v324 = vor.u32 %v322, %v320
      %v326 = vshll.u32 %v270, 16
      %v328 = vrot.slane %v326, 1
      %v329 = vsel %vm309, %v324, %v328
      %v330 = vshrl.u32 %v270, 16
      %v332 = vor.u32 %v330, %v328
      %v334 = vshll.u32 %v271, 16
      %v336 = vrot.slane %v334, 1
      %v337 = vsel %vm309, %v332, %v336
      %v338 = vshrl.u32 %v271, 16
      %v340 = vor.u32 %v338, %v336
      %v342 = vshll.u32 %v308, 16
      %v344 = vrot.slane %v342, 1
      %v345 = vsel %vm309, %v340, %v344
      %v346 = vshrl.u32 %v308, 16
      %v348 = vor.u32 %v346, %v344
      %349 = vrot.lane.b32.xlu0 %v321, 8
      %v350 = vpop.permute.xlu0 %349
      %351 = vrot.lane.b32.xlu0 %v329, 8
      %v352 = vpop.permute.xlu0 %351
      %353 = vrot.lane.b32.xlu0 %v337, 8
      %v354 = vpop.permute.xlu0 %353
      %355 = vrot.lane.b32.xlu0 %v345, 8
      %v356 = vpop.permute.xlu0 %355
      %357 = vrot.lane.b32.xlu0 %v348, 8
      %v358 = vpop.permute.xlu0 %357
      %v368 = vunpack.c.l.b16 %v228
      %v369 = vunpack.c.l.b16 %v229
      %v370 = vunpack.c.l.b16 %v230
      %v371 = vunpack.c.l.b16 %v231
      %v372 = vunpack.c.l.b16 %v232
      %v373 = vunpack.c.l.b16 %v233
      %v374 = vunpack.c.l.b16 %v234
      %v375 = vunpack.c.l.b16 %v235
      %v376 = vunpack.c.l.b16 %v236
      %v377 = vpack.c.b16 %v369, %v368
      %v378 = vpack.c.b16 %v371, %v370
      %v379 = vpack.c.b16 %v373, %v372
      %v380 = vpack.c.b16 %v375, %v374
      %v381 = vpack.c.b16 %v376, %v376
      %382 = vrot.lane.b32.xlu0 %v377, 12
      %v383 = vpop.permute.xlu0 %382
      %384 = vrot.lane.b32.xlu0 %v378, 12
      %v385 = vpop.permute.xlu0 %384
      %386 = vrot.lane.b32.xlu0 %v379, 12
      %v387 = vpop.permute.xlu0 %386
      %388 = vrot.lane.b32.xlu0 %v380, 12
      %v389 = vpop.permute.xlu0 %388
      %390 = vrot.lane.b32.xlu0 %v381, 12
      %v391 = vpop.permute.xlu0 %390
      %v401 = vunpack.c.l.b16 %v241
      %v402 = vunpack.c.l.b16 %v242
      %v403 = vunpack.c.l.b16 %v243
      %v404 = vunpack.c.l.b16 %v244
      %v405 = vunpack.c.l.b16 %v245
      %v406 = vunpack.c.l.b16 %v246
      %v407 = vunpack.c.l.b16 %v247
      %v408 = vunpack.c.l.b16 %v248
      %v409 = vunpack.c.l.b16 %v249
      %v410 = vpack.c.b16 %v402, %v401
      %v411 = vpack.c.b16 %v404, %v403
      %v412 = vpack.c.b16 %v406, %v405
      %v413 = vpack.c.b16 %v408, %v407
      %v414 = vpack.c.b16 %v409, %v409
      %415 = vrot.lane.b32.xlu0 %v410, 16
      %v416 = vpop.permute.xlu0 %415
      %417 = vrot.lane.b32.xlu0 %v411, 16
      %v418 = vpop.permute.xlu0 %417
      %419 = vrot.lane.b32.xlu0 %v412, 16
      %v420 = vpop.permute.xlu0 %419
      %421 = vrot.lane.b32.xlu0 %v413, 16
      %v422 = vpop.permute.xlu0 %421
      %423 = vrot.lane.b32.xlu0 %v414, 16
      %v424 = vpop.permute.xlu0 %423
      %v426 = vunpack.c.l.b16 %v237
      %v427 = vpack.c.b16 %v426, %v376
      %v429 = vshrl.u32 %v377, 16
      %v431 = vshll.u32 %v377, 16
      %v433 = vrot.slane %v431, 1
      %v434 = vor.u32 %v429, %v433
      %v436 = vshll.u32 %v378, 16
      %v438 = vrot.slane %v436, 1
      %v439 = vsel %vm309, %v434, %v438
      %v440 = vshrl.u32 %v378, 16
      %v442 = vor.u32 %v440, %v438
      %v444 = vshll.u32 %v379, 16
      %v446 = vrot.slane %v444, 1
      %v447 = vsel %vm309, %v442, %v446
      %v448 = vshrl.u32 %v379, 16
      %v450 = vor.u32 %v448, %v446
      %v452 = vshll.u32 %v380, 16
      %v454 = vrot.slane %v452, 1
      %v455 = vsel %vm309, %v450, %v454
      %v456 = vshrl.u32 %v380, 16
      %v458 = vor.u32 %v456, %v454
      %v460 = vshll.u32 %v427, 16
      %v462 = vrot.slane %v460, 1
      %v463 = vsel %vm309, %v458, %v462
      %v464 = vshrl.u32 %v427, 16
      %v466 = vor.u32 %v464, %v462
      %467 = vrot.lane.b32.xlu0 %v439, 20
      %v468 = vpop.permute.xlu0 %467
      %469 = vrot.lane.b32.xlu0 %v447, 20
      %v470 = vpop.permute.xlu0 %469
      %471 = vrot.lane.b32.xlu0 %v455, 20
      %v472 = vpop.permute.xlu0 %471
      %473 = vrot.lane.b32.xlu0 %v463, 20
      %v474 = vpop.permute.xlu0 %473
      %475 = vrot.lane.b32.xlu0 %v466, 20
      %v476 = vpop.permute.xlu0 %475
      %v478 = vunpack.c.l.b16 %v210
      %v479 = vpack.c.b16 %v261, %v260
      %v480 = vpack.c.b16 %v263, %v262
      %v481 = vpack.c.b16 %v265, %v264
      %v482 = vpack.c.b16 %v267, %v266
      %v483 = vpack.c.b16 %v478, %v307
      %v485 = vshrl.u32 %v479, 16
      %v487 = vshll.u32 %v479, 16
      %v489 = vrot.slane %v487, 1
      %v490 = vor.u32 %v485, %v489
      %v492 = vshll.u32 %v480, 16
      %v494 = vrot.slane %v492, 1
      %v495 = vsel %vm309, %v490, %v494
      %v496 = vshrl.u32 %v480, 16
      %v498 = vor.u32 %v496, %v494
      %v500 = vshll.u32 %v481, 16
      %v502 = vrot.slane %v500, 1
      %v503 = vsel %vm309, %v498, %v502
      %v504 = vshrl.u32 %v481, 16
      %v506 = vor.u32 %v504, %v502
      %v508 = vshll.u32 %v482, 16
      %v510 = vrot.slane %v508, 1
      %v511 = vsel %vm309, %v506, %v510
      %v512 = vshrl.u32 %v482, 16
      %v514 = vor.u32 %v512, %v510
      %v516 = vshll.u32 %v483, 16
      %v518 = vrot.slane %v516, 1
      %v519 = vsel %vm309, %v514, %v518
      %v520 = vshrl.u32 %v483, 16
      %v522 = vor.u32 %v520, %v518
      %523 = vrot.lane.b32.xlu0 %v495, 24
      %v524 = vpop.permute.xlu0 %523
      %525 = vrot.lane.b32.xlu0 %v503, 24
      %v526 = vpop.permute.xlu0 %525
      %527 = vrot.lane.b32.xlu0 %v511, 24
      %v528 = vpop.permute.xlu0 %527
      %529 = vrot.lane.b32.xlu0 %v519, 24
      %v530 = vpop.permute.xlu0 %529
      %531 = vrot.lane.b32.xlu0 %v522, 24
      %v532 = vpop.permute.xlu0 %531
      %v535 = vunpack.c.l.b16 %v223
      %v536 = vunpack.c.l.b16 %v224
      %v537 = vpack.c.b16 %v284, %v283
      %v538 = vpack.c.b16 %v286, %v285
      %v539 = vpack.c.b16 %v288, %v287
      %v540 = vpack.c.b16 %v290, %v289
      %v541 = vpack.c.b16 %v536, %v535
      %v543 = vshrl.u32 %v537, 16
      %v545 = vshll.u32 %v537, 16
      %v547 = vrot.slane %v545, 1
      %v548 = vor.u32 %v543, %v547
      %v550 = vshll.u32 %v538, 16
      %v552 = vrot.slane %v550, 1
      %v553 = vsel %vm309, %v548, %v552
      %v554 = vshrl.u32 %v538, 16
      %v556 = vor.u32 %v554, %v552
      %v558 = vshll.u32 %v539, 16
      %v560 = vrot.slane %v558, 1
      %v561 = vsel %vm309, %v556, %v560
      %v562 = vshrl.u32 %v539, 16
      %v564 = vor.u32 %v562, %v560
      %v566 = vshll.u32 %v540, 16
      %v568 = vrot.slane %v566, 1
      %v569 = vsel %vm309, %v564, %v568
      %v570 = vshrl.u32 %v540, 16
      %v572 = vor.u32 %v570, %v568
      %v574 = vshll.u32 %v541, 16
      %v576 = vrot.slane %v574, 1
      %v577 = vsel %vm309, %v572, %v576
      %v578 = vshrl.u32 %v541, 16
      %v580 = vor.u32 %v578, %v576
      %581 = vrot.lane.b32.xlu0 %v553, 28
      %v582 = vpop.permute.xlu0 %581
      %583 = vrot.lane.b32.xlu0 %v561, 28
      %v584 = vpop.permute.xlu0 %583
      %585 = vrot.lane.b32.xlu0 %v569, 28
      %v586 = vpop.permute.xlu0 %585
      %587 = vrot.lane.b32.xlu0 %v577, 28
      %v588 = vpop.permute.xlu0 %587
      %589 = vrot.lane.b32.xlu0 %v580, 28
      %v590 = vpop.permute.xlu0 %589
      %vm591 = vcmask 1046528
      %v592 = vrot.slane %v479, 1
      %v593 = vrot.slane %v480, 1
      %v594 = vsel %vm591, %v592, %v593
      %v595 = vrot.slane %v481, 1
      %v596 = vsel %vm591, %v593, %v595
      %v597 = vrot.slane %v482, 1
      %v598 = vsel %vm591, %v595, %v597
      %v599 = vrot.slane %v483, 1
      %v600 = vsel %vm591, %v597, %v599
      %601 = vrot.lane.b32.xlu0 %v594, 32
      %v602 = vpop.permute.xlu0 %601
      %603 = vrot.lane.b32.xlu0 %v596, 32
      %v604 = vpop.permute.xlu0 %603
      %605 = vrot.lane.b32.xlu0 %v598, 32
      %v606 = vpop.permute.xlu0 %605
      %607 = vrot.lane.b32.xlu0 %v600, 32
      %v608 = vpop.permute.xlu0 %607
      %609 = vrot.lane.b32.xlu0 %v599, 32
      %v610 = vpop.permute.xlu0 %609
      %vm611 = vcmask 31744
      %v613 = vsel %vm611, %v268, %v297
      %v615 = vsel %vm611, %v269, %v299
      %v617 = vsel %vm611, %v270, %v301
      %v619 = vsel %vm611, %v271, %v303
      %v622 = vsel %vm611, %v272, %v305
      %vm623 = vcmask 64512
      %v625 = vsel %vm623, %v613, %v350
      %v627 = vsel %vm623, %v615, %v352
      %v629 = vsel %vm623, %v617, %v354
      %v631 = vsel %vm623, %v619, %v356
      %v633 = vsel %vm623, %v622, %v358
      %vm634 = vcmask 97280
      %v636 = vsel %vm634, %v625, %v383
      %v638 = vsel %vm634, %v627, %v385
      %v640 = vsel %vm634, %v629, %v387
      %v642 = vsel %vm634, %v631, %v389
      %v644 = vsel %vm634, %v633, %v391
      %vm645 = vcmask 130048
      %v647 = vsel %vm645, %v636, %v416
      %v649 = vsel %vm645, %v638, %v418
      %v651 = vsel %vm645, %v640, %v420
      %v653 = vsel %vm645, %v642, %v422
      %v655 = vsel %vm645, %v644, %v424
      %vm656 = vcmask 162816
      %v658 = vsel %vm656, %v647, %v468
      %v660 = vsel %vm656, %v649, %v470
      %v662 = vsel %vm656, %v651, %v472
      %v664 = vsel %vm656, %v653, %v474
      %v666 = vsel %vm656, %v655, %v476
      %vm667 = vcmask 195584
      %v669 = vsel %vm667, %v658, %v524
      %v671 = vsel %vm667, %v660, %v526
      %v673 = vsel %vm667, %v662, %v528
      %v675 = vsel %vm667, %v664, %v530
      %v677 = vsel %vm667, %v666, %v532
      %vm678 = vcmask 228352
      %v680 = vsel %vm678, %v669, %v582
      %v682 = vsel %vm678, %v671, %v584
      %v684 = vsel %vm678, %v673, %v586
      %v686 = vsel %vm678, %v675, %v588
      %v688 = vsel %vm678, %v677, %v590
      %vm689 = vcmask 261120
      %v691 = vsel %vm689, %v680, %v602
      %v693 = vsel %vm689, %v682, %v604
      %v695 = vsel %vm689, %v684, %v606
      %v697 = vsel %vm689, %v686, %v608
      %v699 = vsel %vm689, %v688, %v610
      %v700 = vld [vmem:[%s1] sm:$0xf]
      %v701 = vld [vmem:[%s1 + $0x4] sm:$0xf]
      %v702 = vld [vmem:[%s1 + $0x8] sm:$0xf]
      %v703 = vld [vmem:[%s1 + $0xc] sm:$0xf]
      %v704 = vld [vmem:[%s1 + $0x10] sm:$0x3]
      %v705 = vld [vmem:[%s2] sm:$0x1]
      %v707 = vlaneseq
      %v708 = vshrl.u32 %v707, 7
      %v709 = vsub.s32 0, %v708
      %v710 = vrot.slane %v705, %v709
      %v717 = vunpack.c.l.b16 %v700
      %v718 = vunpack.c.l.b16 %v701
      %v719 = vunpack.c.l.b16 %v702
      %v720 = vunpack.c.l.b16 %v703
      %v721 = vunpack.c.l.b16 %v704
      %v722 = vpack.c.b16 %v718, %v717
      %v723 = vpack.c.b16 %v720, %v719
      %v724 = vpack.c.b16 %v721, %v721
      %vm727 = vcmask 293888
      %v728 = vsel %vm727, %v691, 0
      %v730 = vsel %vm727, %v693, 0
      %v732 = vsel %vm727, %v695, 0
      %v734 = vsel %vm727, %v697, 0
      %v736 = vsel %vm727, %v699, 0
      %vm738 = vcmask 1041408
      %v740 = vsel %vm738, %v724, 0
      %742 = vmatprep.subr.bf16.mxu0 0
      %743 = vmatpush1.bf16.msra.mxu0 %v722
      %744 = vmatprep.subr.bf16.mxu0 0
      %745 = vmatpush1.bf16.msra.mxu0 %v723
      %746 = vmatprep.subr.bf16.mxu0 0
      %747 = vmatpush1.bf16.msra.mxu0 %v740
      %748 = vmatprep.subr.bf16.mxu0 0
      %749 = vmatpush1.bf16.msra.mxu0 0
      %750 = vmatprep.subr.bf16.mxu0 0
      %751 = vmatpush1.bf16.msra.mxu0 0
      %752 = vmatprep.subr.bf16.mxu0 0
      %753 = vmatpush1.bf16.msra.mxu0 0
      %754 = vmatprep.subr.bf16.mxu0 0
      %755 = vmatpush1.bf16.msra.mxu0 0
      %756 = vmatprep.subr.bf16.mxu0 0
      %757 = vmatpush1.bf16.msra.mxu0 0
      %758 = vmatprep.subr.bf16.mxu0 0
      %759 = vmatpush1.bf16.msra.mxu0 0
      %760 = vmatprep.subr.bf16.mxu0 0
      %761 = vmatpush1.bf16.msra.mxu0 0
      %762 = vmatprep.subr.bf16.mxu0 0
      %763 = vmatpush1.bf16.msra.mxu0 0
      %764 = vmatprep.subr.bf16.mxu0 0
      %765 = vmatpush1.bf16.msra.mxu0 0
      %766 = vmatprep.subr.bf16.mxu0 0
      %767 = vmatpush1.bf16.msra.mxu0 0
      %768 = vmatprep.subr.bf16.mxu0 0
      %769 = vmatpush1.bf16.msra.mxu0 0
      %770 = vmatprep.subr.bf16.mxu0 0
      %771 = vmatpush1.bf16.msra.mxu0 0
      %772 = vmatprep.subr.bf16.mxu0 0
      %773 = vmatpush1.bf16.msra.mxu0 0
      %774 = vmatprep.mubr.bf16.mxu0 0
      %775 = vmatmul.mubr.bf16.gmra.mrb[0].mxu0 %v728
      %v776 = vpop.f32.mrb[0].mxu0
      %v777 = vadd.f32 %v710, %v776
      %v778 = vpop.f32.mrb[0].mxu0
      %v779 = vpop.f32.mrb[0].mxu0
      %v780 = vadd.f32 %v710, %v779
      %v781 = vpop.f32.mrb[0].mxu0
      %782 = vmatprep.mubr.bf16.mxu0 0
      %783 = vmatmul.mubr.bf16.gmra.mrb[0].mxu0 %v730
      %v784 = vpop.f32.mrb[0].mxu0
      %v785 = vadd.f32 %v710, %v784
      %v786 = vpop.f32.mrb[0].mxu0
      %v787 = vpop.f32.mrb[0].mxu0
      %v788 = vadd.f32 %v710, %v787
      %v789 = vpop.f32.mrb[0].mxu0
      %790 = vmatprep.mubr.bf16.mxu0 0
      %791 = vmatmul.mubr.bf16.gmra.mrb[0].mxu0 %v732
      %v792 = vpop.f32.mrb[0].mxu0
      %v793 = vadd.f32 %v710, %v792
      %v794 = vpop.f32.mrb[0].mxu0
      %v795 = vpop.f32.mrb[0].mxu0
      %v796 = vadd.f32 %v710, %v795
      %v797 = vpop.f32.mrb[0].mxu0
      %798 = vmatprep.mubr.bf16.mxu0 0
      %799 = vmatmul.mubr.bf16.gmra.mrb[0].mxu0 %v734
      %v800 = vpop.f32.mrb[0].mxu0
      %v801 = vadd.f32 %v710, %v800
      %v802 = vpop.f32.mrb[0].mxu0
      %v803 = vpop.f32.mrb[0].mxu0
      %v804 = vadd.f32 %v710, %v803
      %v805 = vpop.f32.mrb[0].mxu0
      %806 = vmatprep.mubr.bf16.mxu0 0
      %807 = vmatmul.mubr.bf16.gmra.mrb[0].mxu0 %v736
      %v808 = vpop.f32.mrb[0].mxu0
      %v809 = vadd.f32 %v710, %v808
      %v810 = vpop.f32.mrb[0].mxu0
      %v811 = vpop.f32.mrb[0].mxu0
      %v812 = vpop.f32.mrb[0].mxu0
      %813 = vdwg.mxu0
      %v814 = vmax.f32 %v777, 0.0
      %v815 = vmax.f32 %v780, 0.0
      %v816 = vmax.f32 %v785, 0.0
      %v817 = vmax.f32 %v788, 0.0
      %v818 = vmax.f32 %v793, 0.0
      %v819 = vmax.f32 %v796, 0.0
      %v820 = vmax.f32 %v801, 0.0
      %v821 = vmax.f32 %v804, 0.0
      %v822 = vmax.f32 %v809, 0.0
      %v823 = vpack.c.bf16 %v815, %v814
      %v824 = vpack.c.bf16 %v817, %v816
      %v825 = vpack.c.bf16 %v819, %v818
      %v826 = vpack.c.bf16 %v821, %v820
      %v827 = vpack.c.bf16 %v822, %v822
      %v833 = vunpack.c.l.b16 %v823
      %v834 = vunpack.c.h.b16 %v823
      %v835 = vunpack.c.l.b16 %v824
      %v836 = vunpack.c.h.b16 %v824
      %v837 = vunpack.c.l.b16 %v825
      %v838 = vunpack.c.h.b16 %v825
      %v839 = vunpack.c.l.b16 %v826
      %v840 = vunpack.c.h.b16 %v826
      %v841 = vunpack.c.l.b16 %v827
      %v842 = vpack.c.b16 %v833, %v833
      %v843 = vpack.c.b16 %v834, %v834
      %v844 = vpack.c.b16 %v835, %v835
      %v845 = vpack.c.b16 %v836, %v836
      %v846 = vpack.c.b16 %v837, %v837
      %v847 = vpack.c.b16 %v838, %v838
      %v848 = vpack.c.b16 %v839, %v839
      %v849 = vpack.c.b16 %v840, %v840
      %v850 = vpack.c.b16 %v841, %v841
      %860 = vst [vmem:[%s192] sm:$0xf] %v842
      %861 = vst [vmem:[%s192 + $0x4] sm:$0xf] %v843
      %862 = vst [vmem:[%s192 + $0x8] sm:$0xf] %v844
      %863 = vst [vmem:[%s192 + $0xc] sm:$0xf] %v845
      %864 = vst [vmem:[%s192 + $0x10] sm:$0xf] %v846
      %865 = vst [vmem:[%s192 + $0x14] sm:$0xf] %v847
      %866 = vst [vmem:[%s192 + $0x18] sm:$0xf] %v848
      %867 = vst [vmem:[%s192 + $0x1c] sm:$0xf] %v849
      %868 = vst [vmem:[%s192 + $0x20] sm:$0xf] %v850
      %s869 = smul.u32 9, %s19
      %p870 = scmp.lt.s32.totalorder %s18, 1
      %s871 = scalar_select %p870, %s18, 1
      %p872 = scmp.lt.s32.totalorder %s869, 8
      %s873 = scalar_select %p872, %s869, 8
      %s874 = smul.addr %s871, 9
      %s875 = sadd.s32 %s873, %s874
      %s876 = smul.addr %s875, 4
      %s877 = scalar_lea.vmem %s3, %s876
      // Predicated region
      $region33: #{basic_block_forward.2} parent=31 // pred_check
        %p878 = pneg %p114
      $region34: #{basic_block_forward.2} parent=31 // pred_check_branch
        %880 = sbr.rel (%p878) target = $region36
      $region35: #{basic_block_forward.2} parent=31 // pred_region
        %s881 = smul.u32 9, %s19
      $region36: #{basic_block_forward.2} parent=31 // pred_fallthru
        _
    $region32: #{basic_block_forward.2} parent=5 // pred_fallthru
      _
    %p882 = scmp.le.s32.totalorder 2, %s9
    // Predicated region
    $region37: #{basic_block_forward.2} parent=5 // pred_check
      %p883 = pneg %p882
    $region38: #{basic_block_forward.2} parent=5 // pred_check_branch
      %885 = sbr.rel (%p883) target = $region40
    $region39: #{basic_block_forward.2} parent=5 // pred_region
      %s886 = ssub.s32 %s9, 2
      // Predicated region
      $region41: #{basic_block_forward.2} parent=39 // pred_check
        %p887 = pneg %p120
      $region42: #{basic_block_forward.2} parent=39 // pred_check_branch
        %889 = sbr.rel (%p887) target = $region44
      $region43: #{basic_block_forward.2} parent=39 // pred_region
        %s890 = smul.u32 9, %s21
        %p891 = scmp.lt.s32.totalorder %s20, 1
        %s892 = scalar_select %p891, %s20, 1
        %p893 = scmp.lt.s32.totalorder %s890, 8
        %s894 = scalar_select %p893, %s890, 8
        %s895 = smul.addr %s892, 9
        %s896 = sadd.s32 %s894, %s895
        %s897 = smul.addr %s896, 4
        %s898 = scalar_lea.vmem %s3, %s897
      $region44: #{basic_block_forward.2} parent=39 // pred_fallthru
        _
    $region40: #{basic_block_forward.2} parent=5 // pred_fallthru
      _
  $region6: #{basic_block_forward.2} parent=0 // loop_footer
    %s13 = sadd.s32 1, %s9
  $region7: #{basic_block_forward.2} parent=0 // loop_footer_branch
    %8 = sbr.rel target = $region3
  $region8: #{basic_block_forward.2} parent=0 // loop_exit
    _

// kernel: basic_block_forward.3
$region0: #{basic_block_forward.3}
  #allocation0 [shape = 'u32[]', space=smem, size = 0x4, offset = 0x4, fixed_abs, tag = 'smem constant byte address 0x4 - core index']
  #allocation1 [shape = 'u32[144,128]{1,0:T(1,128)}', space=vmem, size = 0x12000, scoped, tag = 'internal scratch']
  %s0 = inlined_call_operand.vmem [shape: bf16[2,1,104,8], index: 0, kind: input, shape index: {}]
  %s1 = inlined_call_operand.vmem [shape: bf16[76,128], index: 1, kind: input, shape index: {}]
  %s2 = inlined_call_operand.vmem [shape: bf16[2,80,4], index: 2, kind: input, shape index: {}]
  %s3 = inlined_call_operand.vmem [shape: f32[1,128], index: 3, kind: input, shape index: {}]
  %s4 = inlined_call_operand.vmem [shape: f32[2,80,128], index: 4, kind: output, shape index: {}]
  %s5 = sld [smem:[#allocation0]]
  $region49: #{basic_block_forward.3} parent=0
    _
  %s7 = ssub.s32 1, %s5
  %s8 = scalar_select 0, %s7, %s5
  loop: start=0, step=1, limit=4
  $region2: #{basic_block_forward.3} parent=0 // loop_pre_header
    _
  $region3: #{basic_block_forward.3} parent=0 // loop_header
    %s10 = sphi 0, %s14
    %p11 = scmp.ge.s32.totalorder %s10, 4
    %s17 = sphi 0, %s29
    %s18 = sphi 0, %s25
    %s19 = sphi 0, %s17
    %s20 = sphi 0, %s18
    %s21 = sphi 0, %s19
    %s22 = sphi 0, %s20
    %s32 = sphi 0, %s34
    %s35 = sphi 0, %s32
    %s36 = sphi 0, %s35
    %s52 = sphi 0, %s36
    %s56 = sphi 0, %s56
    %s58 = sphi 0, %s56
    %s59 = sphi 0, %s58
    %s73 = sphi 0, %s59
    %s81 = sphi 0, %s83
    %s84 = sphi 0, %s81
    %s85 = sphi 0, %s84
    %s101 = sphi 0, %s85
    %s105 = sphi 0, %s105
    %s107 = sphi 0, %s105
    %s108 = sphi 0, %s107
    %s122 = sphi 0, %s108
    %s130 = sphi 0, %s132
    %s133 = sphi 0, %s130
    %s134 = sphi 0, %s133
    %s150 = sphi 0, %s134
  $region4: #{basic_block_forward.3} parent=0 // loop_header_branch
    %13 = sbr.rel (%p11) target = $region8
  $region5: #{basic_block_forward.3} parent=0 // loop_body
    %s15 = ssub.s32 %s10, 1
    %s16 = ssub.s32 %s10, 2
    %s23 = sadd.s32 1, %s18
    %p24 = scmp.ge.s32.totalorder %s23, 1
    %s25 = scalar_select %p24, 0, %s23
    %s26 = sadd.s32 1, %s17
    %s27 = scalar_select %p24, %s26, %s17
    %p28 = scmp.ge.s32.totalorder %s27, 2
    %s29 = scalar_select %p28, 0, %s27
    %s30 = ssub.s32 %s17, %s29
    %p31 = scmp.eq.s32.totalorder %s30, 0
    %s33 = sadd.s32 %s32, 1
    %s34 = scalar_select %p31, %s32, %s33
    %p37 = pneg %p31
    %p38 = scmp.eq.s32.totalorder %s10, 1
    %p39 = por %p37, %p38
    %p40 = scmp.ne.s32.totalorder %s32, %s35
    %p41 = scmp.eq.s32.totalorder %s10, 0
    %p42 = por %p40, %p41
    %p43 = scmp.ne.s32.totalorder %s32, %s35
    %p44 = scmp.eq.s32.totalorder %s15, 1
    %p45 = por %p43, %p44
    %p46 = scmp.ne.s32.totalorder %s35, %s36
    %p47 = scmp.eq.s32.totalorder %s15, 0
    %p48 = por %p46, %p47
    %p49 = scmp.ne.s32.totalorder %s35, %s36
    %p50 = scmp.eq.s32.totalorder %s16, 1
    %p51 = por %p49, %p50
    %p53 = scmp.ne.s32.totalorder %s36, %s52
    %p54 = scmp.eq.s32.totalorder %s16, 0
    %p55 = por %p53, %p54
    %s57 = sadd.s32 %s56, 1
    %p60 = scmp.eq.s32.totalorder %s10, 1
    %p61 = scmp.ne.s32.totalorder %s56, %s58
    %p62 = scmp.eq.s32.totalorder %s10, 0
    %p63 = por %p61, %p62
    %p64 = scmp.ne.s32.totalorder %s56, %s58
    %p65 = scmp.eq.s32.totalorder %s15, 1
    %p66 = por %p64, %p65
    %p67 = scmp.ne.s32.totalorder %s58, %s59
    %p68 = scmp.eq.s32.totalorder %s15, 0
    %p69 = por %p67, %p68
    %p70 = scmp.ne.s32.totalorder %s58, %s59
    %p71 = scmp.eq.s32.totalorder %s16, 1
    %p72 = por %p70, %p71
    %p74 = scmp.ne.s32.totalorder %s59, %s73
    %p75 = scmp.eq.s32.totalorder %s16, 0
    %p76 = por %p74, %p75
    %s77 = ssub.s32 %s17, %s29
    %s78 = ssub.s32 %s18, %s25
    %s79 = sor.u32 %s77, %s78
    %p80 = scmp.eq.s32.totalorder %s79, 0
    %s82 = sadd.s32 %s81, 1
    %s83 = scalar_select %p80, %s81, %s82
    %p86 = pneg %p80
    %p87 = scmp.eq.s32.totalorder %s10, 1
    %p88 = por %p86, %p87
    %p89 = scmp.ne.s32.totalorder %s81, %s84
    %p90 = scmp.eq.s32.totalorder %s10, 0
    %p91 = por %p89, %p90
    %p92 = scmp.ne.s32.totalorder %s81, %s84
    %p93 = scmp.eq.s32.totalorder %s15, 1
    %p94 = por %p92, %p93
    %p95 = scmp.ne.s32.totalorder %s84, %s85
    %p96 = scmp.eq.s32.totalorder %s15, 0
    %p97 = por %p95, %p96
    %p98 = scmp.ne.s32.totalorder %s84, %s85
    %p99 = scmp.eq.s32.totalorder %s16, 1
    %p100 = por %p98, %p99
    %p102 = scmp.ne.s32.totalorder %s85, %s101
    %p103 = scmp.eq.s32.totalorder %s16, 0
    %p104 = por %p102, %p103
    %s106 = sadd.s32 %s105, 1
    %p109 = scmp.eq.s32.totalorder %s10, 1
    %p110 = scmp.ne.s32.totalorder %s105, %s107
    %p111 = scmp.eq.s32.totalorder %s10, 0
    %p112 = por %p110, %p111
    %p113 = scmp.ne.s32.totalorder %s105, %s107
    %p114 = scmp.eq.s32.totalorder %s15, 1
    %p115 = por %p113, %p114
    %p116 = scmp.ne.s32.totalorder %s107, %s108
    %p117 = scmp.eq.s32.totalorder %s15, 0
    %p118 = por %p116, %p117
    %p119 = scmp.ne.s32.totalorder %s107, %s108
    %p120 = scmp.eq.s32.totalorder %s16, 1
    %p121 = por %p119, %p120
    %p123 = scmp.ne.s32.totalorder %s108, %s122
    %p124 = scmp.eq.s32.totalorder %s16, 0
    %p125 = por %p123, %p124
    %s126 = ssub.s32 %s17, %s29
    %s127 = ssub.s32 %s18, %s25
    %s128 = sor.u32 %s126, %s127
    %p129 = scmp.eq.s32.totalorder %s128, 0
    %s131 = sadd.s32 %s130, 1
    %s132 = scalar_select %p129, %s130, %s131
    %p135 = pneg %p129
    %p136 = scmp.eq.s32.totalorder %s10, 1
    %p137 = por %p135, %p136
    %p138 = scmp.ne.s32.totalorder %s130, %s133
    %p139 = scmp.eq.s32.totalorder %s10, 0
    %p140 = por %p138, %p139
    %p141 = scmp.ne.s32.totalorder %s130, %s133
    %p142 = scmp.eq.s32.totalorder %s15, 1
    %p143 = por %p141, %p142
    %p144 = scmp.ne.s32.totalorder %s133, %s134
    %p145 = scmp.eq.s32.totalorder %s15, 0
    %p146 = por %p144, %p145
    %p147 = scmp.ne.s32.totalorder %s133, %s134
    %p148 = scmp.eq.s32.totalorder %s16, 1
    %p149 = por %p147, %p148
    %p151 = scmp.ne.s32.totalorder %s134, %s150
    %p152 = scmp.eq.s32.totalorder %s16, 0
    %p153 = por %p151, %p152
    %p154 = scmp.le.s32.totalorder 1, %s10
    %p155 = scmp.lt.s32.totalorder %s10, 3
    %p156 = pnand %p154, %p155
    %p157 = pneg %p156
    // Predicated region
    $region9: #{basic_block_forward.3} parent=5 // pred_check
      _
    $region10: #{basic_block_forward.3} parent=5 // pred_check_branch
      %159 = sbr.rel (%p156) target = $region12
    $region11: #{basic_block_forward.3} parent=5 // pred_region
      %s160 = ssub.s32 %s10, 1
      // Predicated region
      $region13: #{basic_block_forward.3} parent=11 // pred_check
        %p161 = pneg %p69
      $region14: #{basic_block_forward.3} parent=11 // pred_check_branch
        %163 = sbr.rel (%p161) target = $region16
      $region15: #{basic_block_forward.3} parent=11 // pred_region
        _
      $region16: #{basic_block_forward.3} parent=11 // pred_fallthru
        _
      // Predicated region
      $region17: #{basic_block_forward.3} parent=11 // pred_check
        %p164 = pneg %p118
      $region18: #{basic_block_forward.3} parent=11 // pred_check_branch
        %166 = sbr.rel (%p164) target = $region20
      $region19: #{basic_block_forward.3} parent=11 // pred_region
        _
      $region20: #{basic_block_forward.3} parent=11 // pred_fallthru
        _
    $region12: #{basic_block_forward.3} parent=5 // pred_fallthru
      _
    %p167 = scmp.lt.s32.totalorder %s10, 2
    // Predicated region
    $region21: #{basic_block_forward.3} parent=5 // pred_check
      %p168 = pneg %p167
    $region22: #{basic_block_forward.3} parent=5 // pred_check_branch
      %170 = sbr.rel (%p168) target = $region24
    $region23: #{basic_block_forward.3} parent=5 // pred_region
      // Predicated region
      $region25: #{basic_block_forward.3} parent=23 // pred_check
        %p171 = pneg %p42
      $region26: #{basic_block_forward.3} parent=23 // pred_check_branch
        %173 = sbr.rel (%p171) target = $region28
      $region27: #{basic_block_forward.3} parent=23 // pred_region
        %p174 = scmp.lt.s32.totalorder %s17, 1
        %s175 = scalar_select %p174, %s17, 1
        %s176 = smul.addr %s175, 13
        %s177 = smul.addr %s176, 4
        %s178 = scalar_lea.vmem %s0, %s177
      $region28: #{basic_block_forward.3} parent=23 // pred_fallthru
        _
      // Predicated region
      $region29: #{basic_block_forward.3} parent=23 // pred_check
        %p179 = pneg %p91
      $region30: #{basic_block_forward.3} parent=23 // pred_check_branch
        %181 = sbr.rel (%p179) target = $region32
      $region31: #{basic_block_forward.3} parent=23 // pred_region
        %s182 = smul.u32 10, %s18
        %p183 = scmp.lt.s32.totalorder %s17, 1
        %s184 = scalar_select %p183, %s17, 1
        %p185 = scmp.lt.s32.totalorder %s182, 9
        %s186 = scalar_select %p185, %s182, 9
        %s187 = smul.addr %s184, 10
        %s188 = sadd.s32 %s186, %s187
        %s189 = smul.addr %s188, 4
        %s190 = scalar_lea.vmem %s2, %s189
        %s191 = smul.u32 10, %s18
      $region32: #{basic_block_forward.3} parent=23 // pred_fallthru
        _
    $region24: #{basic_block_forward.3} parent=5 // pred_fallthru
      _
    %p192 = scmp.le.s32.totalorder 1, %s10
    %p193 = scmp.lt.s32.totalorder %s10, 3
    %p194 = pnand %p192, %p193
    %p195 = pneg %p194
    // Predicated region
    $region33: #{basic_block_forward.3} parent=5 // pred_check
      _
    $region34: #{basic_block_forward.3} parent=5 // pred_check_branch
      %197 = sbr.rel (%p194) target = $region36
    $region35: #{basic_block_forward.3} parent=5 // pred_region
      %s198 = ssub.s32 %s10, 1
      %p199 = scmp.lt.s32.totalorder %s19, 1
      %s200 = scalar_select %p199, %s19, 1
      %s201 = smul.addr %s200, 13
      %s202 = smul.addr %s201, 4
      %s203 = scalar_lea.vmem %s0, %s202
      %p204 = pneg %p48
      %p205 = pneg %p45
      %p206 = pneg %p69
      %p207 = pneg %p66
      %s208 = smul.u32 10, %s20
      %p209 = scmp.lt.s32.totalorder %s19, 1
      %s210 = scalar_select %p209, %s19, 1
      %p211 = scmp.lt.s32.totalorder %s208, 9
      %s212 = scalar_select %p211, %s208, 9
      %s213 = smul.addr %s210, 10
      %s214 = sadd.s32 %s212, %s213
      %s215 = smul.addr %s214, 4
      %s216 = scalar_lea.vmem %s2, %s215
      %p217 = pneg %p97
      %p218 = pneg %p94
      %p219 = pneg %p118
      %p220 = pneg %p115
      %p221 = pneg %p146
      %p222 = pneg %p143
      %s223 = smul.u32 10, %s20
      %p224 = scmp.lt.s32.totalorder %s19, 1
      %s225 = scalar_select %p224, %s19, 1
      %p226 = scmp.lt.s32.totalorder %s223, 9
      %s227 = scalar_select %p226, %s223, 9
      %s228 = smul.addr %s225, 10
      %s229 = sadd.s32 %s227, %s228
      %s230 = smul.addr %s229, 8
      %s231 = scalar_lea.vmem %s4, %s230
      %p232 = scmp.lt.s32.totalorder %s19, 1
      %s233 = scalar_select %p232, %s19, 1
      %s234 = smul.addr %s233, 13
      %s235 = smul.addr %s234, 4
      %s236 = scalar_lea.vmem %s0, %s235
      %s237 = smul.u32 10, %s20
      %p238 = scmp.lt.s32.totalorder %s19, 1
      %s239 = scalar_select %p238, %s19, 1
      %p240 = scmp.lt.s32.totalorder %s237, 9
      %s241 = scalar_select %p240, %s237, 9
      %s242 = smul.addr %s239, 10
      %s243 = sadd.s32 %s241, %s242
      %s244 = smul.addr %s243, 4
      %s245 = scalar_lea.vmem %s2, %s244
      %s246 = smul.u32 10, %s20
      %s247 = smul.u32 10, %s20
      %p248 = scmp.lt.s32.totalorder %s19, 1
      %s249 = scalar_select %p248, %s19, 1
      %p250 = scmp.lt.s32.totalorder %s247, 9
      %s251 = scalar_select %p250, %s247, 9
      %s252 = smul.addr %s249, 10
      %s253 = sadd.s32 %s251, %s252
      %s254 = smul.addr %s253, 8
      %s255 = scalar_lea.vmem %s4, %s254
      %s256 = smul.u32 10, %s20
      %s258 = smul.u32 %s20, 80
      %s259 = sshra.s32 %s258, 3
      %s260 = sand.u32 %s258, 7
      %s261 = smul.addr %s259, 4
      %s262 = scalar_lea.vmem %s236, %s261
      %v263 = vld [vmem:[%s262] sm:$0xf]
      %v264 = vld [vmem:[%s262 + $0x4] sm:$0xf]
      %v265 = vld [vmem:[%s262 + $0x8] sm:$0xf]
      %v266 = vld [vmem:[%s262 + $0xc] sm:$0xf]
      %v267 = vld [vmem:[%s262 + $0x10] sm:$0xf]
      %v268 = vld [vmem:[%s262 + $0x14] sm:$0xf]
      %v269 = vld [vmem:[%s262 + $0x18] sm:$0xf]
      %v270 = vld [vmem:[%s262 + $0x1c] sm:$0xf]
      %v271 = vld [vmem:[%s262 + $0x20] sm:$0xf]
      %v272 = vld [vmem:[%s262 + $0x24] sm:$0xf]
      %v273 = vld [vmem:[%s262 + $0x28] sm:$0xf]
      %v274 = vld [vmem:[%s262 + $0x2c] sm:$0xf]
      %v275 = vld [vmem:[%s262 + $0x30] sm:$0xf]
      %v276 = vld [vmem:[%s245] sm:$0xf]
      %v277 = vld [vmem:[%s245 + $0x4] sm:$0xf]
      %v278 = vld [vmem:[%s245 + $0x8] sm:$0xf]
      %v279 = vld [vmem:[%s245 + $0xc] sm:$0xf]
      %v280 = vld [vmem:[%s245 + $0x10] sm:$0xf]
      %v281 = vld [vmem:[%s245 + $0x14] sm:$0xf]
      %v282 = vld [vmem:[%s245 + $0x18] sm:$0xf]
      %v283 = vld [vmem:[%s245 + $0x1c] sm:$0xf]
      %v284 = vld [vmem:[%s245 + $0x20] sm:$0xf]
      %v285 = vld [vmem:[%s245 + $0x24] sm:$0xf]
      %v296 = vunpack.c.l.b16 %v263
      %v297 = vunpack.c.l.b16 %v264
      %v298 = vunpack.c.l.b16 %v265
      %v299 = vunpack.c.l.b16 %v266
      %v300 = vunpack.c.l.b16 %v267
      %v301 = vunpack.c.l.b16 %v268
      %v302 = vunpack.c.l.b16 %v269
      %v303 = vunpack.c.l.b16 %v270
      %v304 = vunpack.c.l.b16 %v271
      %v305 = vunpack.c.l.b16 %v272
      %v306 = vpack.c.b16 %v297, %v296
      %v307 = vpack.c.b16 %v299, %v298
      %v308 = vpack.c.b16 %v301, %v300
      %v309 = vpack.c.b16 %v303, %v302
      %v310 = vpack.c.b16 %v305, %v304
      %v312 = vunpack.c.l.b16 %v273
      %v313 = vpack.c.b16 %v312, %v312
      %vm314 = vsmask.f32 7424
      %v316 = vshrl.u32 %v306, 16
      %v318 = vshll.u32 %v306, 16
      %v320 = vrot.slane %v318, 1
      %v321 = vor.u32 %v316, %v320
      %v323 = vshll.u32 %v307, 16
      %v325 = vrot.slane %v323, 1
      %v326 = vsel %vm314, %v321, %v325
      %v327 = vshrl.u32 %v307, 16
      %v329 = vor.u32 %v327, %v325
      %v331 = vshll.u32 %v308, 16
      %v333 = vrot.slane %v331, 1
      %v334 = vsel %vm314, %v329, %v333
      %v335 = vshrl.u32 %v308, 16
      %v337 = vor.u32 %v335, %v333
      %v339 = vshll.u32 %v309, 16
      %v341 = vrot.slane %v339, 1
      %v342 = vsel %vm314, %v337, %v341
      %v343 = vshrl.u32 %v309, 16
      %v345 = vor.u32 %v343, %v341
      %v347 = vshll.u32 %v310, 16
      %v349 = vrot.slane %v347, 1
      %v350 = vsel %vm314, %v345, %v349
      %v351 = vshrl.u32 %v310, 16
      %v353 = vor.u32 %v351, %v349
      %v355 = vshll.u32 %v313, 16
      %v357 = vrot.slane %v355, 1
      %v358 = vsel %vm314, %v353, %v357
      %359 = vrot.lane.b32.xlu0 %v326, 8
      %v360 = vpop.permute.xlu0 %359
      %361 = vrot.lane.b32.xlu0 %v334, 8
      %v362 = vpop.permute.xlu0 %361
      %363 = vrot.lane.b32.xlu0 %v342, 8
      %v364 = vpop.permute.xlu0 %363
      %365 = vrot.lane.b32.xlu0 %v350, 8
      %v366 = vpop.permute.xlu0 %365
      %367 = vrot.lane.b32.xlu0 %v358, 8
      %v368 = vpop.permute.xlu0 %367
      %vm369 = vcmask 1046528
      %v370 = vrot.slane %v306, 1
      %v371 = vrot.slane %v307, 1
      %v372 = vsel %vm369, %v370, %v371
      %v373 = vrot.slane %v308, 1
      %v374 = vsel %vm369, %v371, %v373
      %v375 = vrot.slane %v309, 1
      %v376 = vsel %vm369, %v373, %v375
      %v377 = vrot.slane %v310, 1
      %v378 = vsel %vm369, %v375, %v377
      %v379 = vrot.slane %v313, 1
      %v380 = vsel %vm369, %v377, %v379
      %381 = vrot.lane.b32.xlu0 %v372, 16
      %v382 = vpop.permute.xlu0 %381
      %383 = vrot.lane.b32.xlu0 %v374, 16
      %v384 = vpop.permute.xlu0 %383
      %385 = vrot.lane.b32.xlu0 %v376, 16
      %v386 = vpop.permute.xlu0 %385
      %387 = vrot.lane.b32.xlu0 %v378, 16
      %v388 = vpop.permute.xlu0 %387
      %389 = vrot.lane.b32.xlu0 %v380, 16
      %v390 = vpop.permute.xlu0 %389
      %v392 = vunpack.c.l.b16 %v274
      %v393 = vpack.c.b16 %v298, %v297
      %v394 = vpack.c.b16 %v300, %v299
      %v395 = vpack.c.b16 %v302, %v301
      %v396 = vpack.c.b16 %v304, %v303
      %v397 = vpack.c.b16 %v312, %v305
      %v398 = vpack.c.b16 %v392, %v392
      %v399 = vrot.slane %v393, 1
      %v400 = vrot.slane %v394, 1
      %v401 = vsel %vm369, %v399, %v400
      %v402 = vrot.slane %v395, 1
      %v403 = vsel %vm369, %v400, %v402
      %v404 = vrot.slane %v396, 1
      %v405 = vsel %vm369, %v402, %v404
      %v406 = vrot.slane %v397, 1
      %v407 = vsel %vm369, %v404, %v406
      %v408 = vrot.slane %v398, 1
      %v409 = vsel %vm369, %v406, %v408
      %410 = vrot.lane.b32.xlu0 %v401, 24
      %v411 = vpop.permute.xlu0 %410
      %412 = vrot.lane.b32.xlu0 %v403, 24
      %v413 = vpop.permute.xlu0 %412
      %414 = vrot.lane.b32.xlu0 %v405, 24
      %v415 = vpop.permute.xlu0 %414
      %416 = vrot.lane.b32.xlu0 %v407, 24
      %v417 = vpop.permute.xlu0 %416
      %418 = vrot.lane.b32.xlu0 %v409, 24
      %v419 = vpop.permute.xlu0 %418
      %vm420 = vsmask.f32 6400
      %v422 = vshrl.u32 %v393, 16
      %v424 = vrot.slane %v422, 1
      %v425 = vshll.u32 %v393, 16
      %v427 = vrot.slane %v425, 2
      %v428 = vor.u32 %v424, %v427
      %v430 = vshrl.u32 %v394, 16
      %v432 = vrot.slane %v430, 1
      %v433 = vshll.u32 %v394, 16
      %v435 = vrot.slane %v433, 2
      %v436 = vor.u32 %v432, %v435
      %v437 = vsel %vm420, %v428, %v436
      %v439 = vshrl.u32 %v395, 16
      %v441 = vrot.slane %v439, 1
      %v442 = vshll.u32 %v395, 16
      %v444 = vrot.slane %v442, 2
      %v445 = vor.u32 %v441, %v444
      %v446 = vsel %vm420, %v436, %v445
      %v448 = vshrl.u32 %v396, 16
      %v450 = vrot.slane %v448, 1
      %v451 = vshll.u32 %v396, 16
      %v453 = vrot.slane %v451, 2
      %v454 = vor.u32 %v450, %v453
      %v455 = vsel %vm420, %v445, %v454
      %v457 = vshrl.u32 %v397, 16
      %v459 = vrot.slane %v457, 1
      %v460 = vshll.u32 %v397, 16
      %v462 = vrot.slane %v460, 2
      %v463 = vor.u32 %v459, %v462
      %v464 = vsel %vm420, %v454, %v463
      %v466 = vshrl.u32 %v398, 16
      %v468 = vrot.slane %v466, 1
      %v469 = vshll.u32 %v398, 16
      %v471 = vrot.slane %v469, 2
      %v472 = vor.u32 %v468, %v471
      %v473 = vsel %vm420, %v463, %v472
      %474 = vrot.lane.b32.xlu0 %v437, 32
      %v475 = vpop.permute.xlu0 %474
      %476 = vrot.lane.b32.xlu0 %v446, 32
      %v477 = vpop.permute.xlu0 %476
      %478 = vrot.lane.b32.xlu0 %v455, 32
      %v479 = vpop.permute.xlu0 %478
      %480 = vrot.lane.b32.xlu0 %v464, 32
      %v481 = vpop.permute.xlu0 %480
      %482 = vrot.lane.b32.xlu0 %v473, 32
      %v483 = vpop.permute.xlu0 %482
      %vm484 = vcmask 1045504
      %v485 = vrot.slane %v393, 2
      %v486 = vrot.slane %v394, 2
      %v487 = vsel %vm484, %v485, %v486
      %v488 = vrot.slane %v395, 2
      %v489 = vsel %vm484, %v486, %v488
      %v490 = vrot.slane %v396, 2
      %v491 = vsel %vm484, %v488, %v490
      %v492 = vrot.slane %v397, 2
      %v493 = vsel %vm484, %v490, %v492
      %v494 = vrot.slane %v398, 2
      %v495 = vsel %vm484, %v492, %v494
      %496 = vrot.lane.b32.xlu0 %v487, 40
      %v497 = vpop.permute.xlu0 %496
      %498 = vrot.lane.b32.xlu0 %v489, 40
      %v499 = vpop.permute.xlu0 %498
      %500 = vrot.lane.b32.xlu0 %v491, 40
      %v501 = vpop.permute.xlu0 %500
      %502 = vrot.lane.b32.xlu0 %v493, 40
      %v503 = vpop.permute.xlu0 %502
      %504 = vrot.lane.b32.xlu0 %v495, 40
      %v505 = vpop.permute.xlu0 %504
      %v507 = vunpack.c.l.b16 %v275
      %v508 = vpack.c.b16 %v392, %v312
      %v509 = vpack.c.b16 %v507, %v507
      %v510 = vrot.slane %v307, 2
      %v511 = vrot.slane %v308, 2
      %v512 = vsel %vm484, %v510, %v511
      %v513 = vrot.slane %v309, 2
      %v514 = vsel %vm484, %v511, %v513
      %v515 = vrot.slane %v310, 2
      %v516 = vsel %vm484, %v513, %v515
      %v517 = vrot.slane %v508, 2
      %v518 = vsel %vm484, %v515, %v517
      %v519 = vrot.slane %v509, 2
      %v520 = vsel %vm484, %v517, %v519
      %521 = vrot.lane.b32.xlu0 %v512, 48
      %v522 = vpop.permute.xlu0 %521
      %523 = vrot.lane.b32.xlu0 %v514, 48
      %v524 = vpop.permute.xlu0 %523
      %525 = vrot.lane.b32.xlu0 %v516, 48
      %v526 = vpop.permute.xlu0 %525
      %527 = vrot.lane.b32.xlu0 %v518, 48
      %v528 = vpop.permute.xlu0 %527
      %529 = vrot.lane.b32.xlu0 %v520, 48
      %v530 = vpop.permute.xlu0 %529
      %vm531 = vsmask.f32 5376
      %v532 = vrot.slane %v327, 2
      %v533 = vrot.slane %v323, 3
      %v534 = vor.u32 %v532, %v533
      %v535 = vrot.slane %v335, 2
      %v536 = vrot.slane %v331, 3
      %v537 = vor.u32 %v535, %v536
      %v538 = vsel %vm531, %v534, %v537
      %v539 = vrot.slane %v343, 2
      %v540 = vrot.slane %v339, 3
      %v541 = vor.u32 %v539, %v540
      %v542 = vsel %vm531, %v537, %v541
      %v543 = vrot.slane %v351, 2
      %v544 = vrot.slane %v347, 3
      %v545 = vor.u32 %v543, %v544
      %v546 = vsel %vm531, %v541, %v545
      %v548 = vshrl.u32 %v508, 16
      %v550 = vrot.slane %v548, 2
      %v551 = vshll.u32 %v508, 16
      %v553 = vrot.slane %v551, 3
      %v554 = vor.u32 %v550, %v553
      %v555 = vsel %vm531, %v545, %v554
      %v557 = vshrl.u32 %v509, 16
      %v559 = vrot.slane %v557, 2
      %v560 = vshll.u32 %v509, 16
      %v562 = vrot.slane %v560, 3
      %v563 = vor.u32 %v559, %v562
      %v564 = vsel %vm531, %v554, %v563
      %565 = vrot.lane.b32.xlu0 %v538, 56
      %v566 = vpop.permute.xlu0 %565
      %567 = vrot.lane.b32.xlu0 %v542, 56
      %v568 = vpop.permute.xlu0 %567
      %569 = vrot.lane.b32.xlu0 %v546, 56
      %v570 = vpop.permute.xlu0 %569
      %571 = vrot.lane.b32.xlu0 %v555, 56
      %v572 = vpop.permute.xlu0 %571
      %573 = vrot.lane.b32.xlu0 %v564, 56
      %v574 = vpop.permute.xlu0 %573
      %vm575 = vcmask 1044480
      %v576 = vrot.slane %v307, 3
      %v577 = vrot.slane %v308, 3
      %v578 = vsel %vm575, %v576, %v577
      %v579 = vrot.slane %v309, 3
      %v580 = vsel %vm575, %v577, %v579
      %v581 = vrot.slane %v310, 3
      %v582 = vsel %vm575, %v579, %v581
      %v583 = vrot.slane %v508, 3
      %v584 = vsel %vm575, %v581, %v583
      %v585 = vrot.slane %v509, 3
      %v586 = vsel %vm575, %v583, %v585
      %587 = vrot.lane.b32.xlu0 %v578, 64
      %v588 = vpop.permute.xlu0 %587
      %589 = vrot.lane.b32.xlu0 %v580, 64
      %v590 = vpop.permute.xlu0 %589
      %591 = vrot.lane.b32.xlu0 %v582, 64
      %v592 = vpop.permute.xlu0 %591
      %593 = vrot.lane.b32.xlu0 %v584, 64
      %v594 = vpop.permute.xlu0 %593
      %595 = vrot.lane.b32.xlu0 %v586, 64
      %v596 = vpop.permute.xlu0 %595
      %v607 = vunpack.c.l.b16 %v276
      %v608 = vunpack.c.l.b16 %v277
      %v609 = vunpack.c.l.b16 %v278
      %v610 = vunpack.c.l.b16 %v279
      %v611 = vunpack.c.l.b16 %v280
      %v612 = vunpack.c.l.b16 %v281
      %v613 = vunpack.c.l.b16 %v282
      %v614 = vunpack.c.l.b16 %v283
      %v615 = vunpack.c.l.b16 %v284
      %v616 = vunpack.c.l.b16 %v285
      %v617 = vpack.c.b16 %v608, %v607
      %v618 = vpack.c.b16 %v610, %v609
      %v619 = vpack.c.b16 %v612, %v611
      %v620 = vpack.c.b16 %v614, %v613
      %v621 = vpack.c.b16 %v616, %v615
      %622 = vrot.lane.b32.xlu0 %v617, 72
      %v623 = vpop.permute.xlu0 %622
      %624 = vrot.lane.b32.xlu0 %v618, 72
      %v625 = vpop.permute.xlu0 %624
      %626 = vrot.lane.b32.xlu0 %v619, 72
      %v627 = vpop.permute.xlu0 %626
      %628 = vrot.lane.b32.xlu0 %v620, 72
      %v629 = vpop.permute.xlu0 %628
      %630 = vrot.lane.b32.xlu0 %v621, 72
      %v631 = vpop.permute.xlu0 %630
      %vm632 = vcmask 64512
      %v634 = vsel %vm632, %v306, %v360
      %v636 = vsel %vm632, %v307, %v362
      %v638 = vsel %vm632, %v308, %v364
      %v640 = vsel %vm632, %v309, %v366
      %v642 = vsel %vm632, %v310, %v368
      %vm643 = vcmask 130048
      %v645 = vsel %vm643, %v634, %v382
      %v647 = vsel %vm643, %v636, %v384
      %v649 = vsel %vm643, %v638, %v386
      %v651 = vsel %vm643, %v640, %v388
      %v653 = vsel %vm643, %v642, %v390
      %vm654 = vcmask 195584
      %v656 = vsel %vm654, %v645, %v411
      %v658 = vsel %vm654, %v647, %v413
      %v660 = vsel %vm654, %v649, %v415
      %v662 = vsel %vm654, %v651, %v417
      %v664 = vsel %vm654, %v653, %v419
      %vm665 = vcmask 261120
      %v667 = vsel %vm665, %v656, %v475
      %v669 = vsel %vm665, %v658, %v477
      %v671 = vsel %vm665, %v660, %v479
      %v673 = vsel %vm665, %v662, %v481
      %v675 = vsel %vm665, %v664, %v483
      %vm676 = vcmask 326656
      %v678 = vsel %vm676, %v667, %v497
      %v680 = vsel %vm676, %v669, %v499
      %v682 = vsel %vm676, %v671, %v501
      %v684 = vsel %vm676, %v673, %v503
      %v686 = vsel %vm676, %v675, %v505
      %vm687 = vcmask 392192
      %v689 = vsel %vm687, %v678, %v522
      %v691 = vsel %vm687, %v680, %v524
      %v693 = vsel %vm687, %v682, %v526
      %v695 = vsel %vm687, %v684, %v528
      %v697 = vsel %vm687, %v686, %v530
      %vm698 = vcmask 457728
      %v700 = vsel %vm698, %v689, %v566
      %v702 = vsel %vm698, %v691, %v568
      %v704 = vsel %vm698, %v693, %v570
      %v706 = vsel %vm698, %v695, %v572
      %v708 = vsel %vm698, %v697, %v574
      %vm709 = vcmask 523264
      %v711 = vsel %vm709, %v700, %v588
      %v713 = vsel %vm709, %v702, %v590
      %v715 = vsel %vm709, %v704, %v592
      %v717 = vsel %vm709, %v706, %v594
      %v719 = vsel %vm709, %v708, %v596
      %vm720 = vcmask 588800
      %v722 = vsel %vm720, %v711, %v623
      %v724 = vsel %vm720, %v713, %v625
      %v726 = vsel %vm720, %v715, %v627
      %v728 = vsel %vm720, %v717, %v629
      %v730 = vsel %vm720, %v719, %v631
      %v731 = vld [vmem:[%s1] sm:$0xf]
      %v732 = vld [vmem:[%s1 + $0x4] sm:$0xf]
      %v733 = vld [vmem:[%s1 + $0x8] sm:$0xf]
      %v734 = vld [vmem:[%s1 + $0xc] sm:$0xf]
      %v735 = vld [vmem:[%s1 + $0x10] sm:$0xf]
      %v736 = vld [vmem:[%s1 + $0x14] sm:$0xf]
      %v737 = vld [vmem:[%s1 + $0x18] sm:$0xf]
      %v738 = vld [vmem:[%s1 + $0x1c] sm:$0xf]
      %v739 = vld [vmem:[%s1 + $0x20] sm:$0xf]
      %v740 = vld [vmem:[%s1 + $0x24] sm:$0x3]
      %v741 = vld [vmem:[%s3] sm:$0x1]
      %v743 = vlaneseq
      %v744 = vshrl.u32 %v743, 7
      %v745 = vsub.s32 0, %v744
      %v746 = vrot.slane %v741, %v745
      %v758 = vunpack.c.l.b16 %v731
      %v759 = vunpack.c.l.b16 %v732
      %v760 = vunpack.c.l.b16 %v733
      %v761 = vunpack.c.l.b16 %v734
      %v762 = vunpack.c.l.b16 %v735
      %v763 = vunpack.c.l.b16 %v736
      %v764 = vunpack.c.l.b16 %v737
      %v765 = vunpack.c.l.b16 %v738
      %v766 = vunpack.c.l.b16 %v739
      %v767 = vunpack.c.l.b16 %v740
      %v768 = vpack.c.b16 %v759, %v758
      %v769 = vpack.c.b16 %v761, %v760
      %v770 = vpack.c.b16 %v763, %v762
      %v771 = vpack.c.b16 %v765, %v764
      %v772 = vpack.c.b16 %v767, %v766
      %vm777 = vcmask 621568
      %v778 = vsel %vm777, %v722, 0
      %v780 = vsel %vm777, %v724, 0
      %v782 = vsel %vm777, %v726, 0
      %v784 = vsel %vm777, %v728, 0
      %v786 = vsel %vm777, %v730, 0
      %vm788 = vcmask 1045504
      %v790 = vsel %vm788, %v772, 0
      %792 = vmatprep.subr.bf16.mxu0 0
      %793 = vmatpush1.bf16.msra.mxu0 %v768
      %794 = vmatprep.subr.bf16.mxu0 0
      %795 = vmatpush1.bf16.msra.mxu0 %v769
      %796 = vmatprep.subr.bf16.mxu0 0
      %797 = vmatpush1.bf16.msra.mxu0 %v770
      %798 = vmatprep.subr.bf16.mxu0 0
      %799 = vmatpush1.bf16.msra.mxu0 %v771
      %800 = vmatprep.subr.bf16.mxu0 0
      %801 = vmatpush1.bf16.msra.mxu0 %v790
      %802 = vmatprep.subr.bf16.mxu0 0
      %803 = vmatpush1.bf16.msra.mxu0 0
      %804 = vmatprep.subr.bf16.mxu0 0
      %805 = vmatpush1.bf16.msra.mxu0 0
      %806 = vmatprep.subr.bf16.mxu0 0
      %807 = vmatpush1.bf16.msra.mxu0 0
      %808 = vmatprep.subr.bf16.mxu0 0
      %809 = vmatpush1.bf16.msra.mxu0 0
      %810 = vmatprep.subr.bf16.mxu0 0
      %811 = vmatpush1.bf16.msra.mxu0 0
      %812 = vmatprep.subr.bf16.mxu0 0
      %813 = vmatpush1.bf16.msra.mxu0 0
      %814 = vmatprep.subr.bf16.mxu0 0
      %815 = vmatpush1.bf16.msra.mxu0 0
      %816 = vmatprep.subr.bf16.mxu0 0
      %817 = vmatpush1.bf16.msra.mxu0 0
      %818 = vmatprep.subr.bf16.mxu0 0
      %819 = vmatpush1.bf16.msra.mxu0 0
      %820 = vmatprep.subr.bf16.mxu0 0
      %821 = vmatpush1.bf16.msra.mxu0 0
      %822 = vmatprep.subr.bf16.mxu0 0
      %823 = vmatpush1.bf16.msra.mxu0 0
      %824 = vmatprep.mubr.bf16.mxu0 0
      %825 = vmatmul.mubr.bf16.gmra.mrb[0].mxu0 %v778
      %v826 = vpop.f32.mrb[0].mxu0
      %v827 = vadd.f32 %v746, %v826
      %v828 = vpop.f32.mrb[0].mxu0
      %v829 = vpop.f32.mrb[0].mxu0
      %v830 = vadd.f32 %v746, %v829
      %v831 = vpop.f32.mrb[0].mxu0
      %832 = vmatprep.mubr.bf16.mxu0 0
      %833 = vmatmul.mubr.bf16.gmra.mrb[0].mxu0 %v780
      %v834 = vpop.f32.mrb[0].mxu0
      %v835 = vadd.f32 %v746, %v834
      %v836 = vpop.f32.mrb[0].mxu0
      %v837 = vpop.f32.mrb[0].mxu0
      %v838 = vadd.f32 %v746, %v837
      %v839 = vpop.f32.mrb[0].mxu0
      %840 = vmatprep.mubr.bf16.mxu0 0
      %841 = vmatmul.mubr.bf16.gmra.mrb[0].mxu0 %v782
      %v842 = vpop.f32.mrb[0].mxu0
      %v843 = vadd.f32 %v746, %v842
      %v844 = vpop.f32.mrb[0].mxu0
      %v845 = vpop.f32.mrb[0].mxu0
      %v846 = vadd.f32 %v746, %v845
      %v847 = vpop.f32.mrb[0].mxu0
      %848 = vmatprep.mubr.bf16.mxu0 0
      %849 = vmatmul.mubr.bf16.gmra.mrb[0].mxu0 %v784
      %v850 = vpop.f32.mrb[0].mxu0
      %v851 = vadd.f32 %v746, %v850
      %v852 = vpop.f32.mrb[0].mxu0
      %v853 = vpop.f32.mrb[0].mxu0
      %v854 = vadd.f32 %v746, %v853
      %v855 = vpop.f32.mrb[0].mxu0
      %856 = vmatprep.mubr.bf16.mxu0 0
      %857 = vmatmul.mubr.bf16.gmra.mrb[0].mxu0 %v786
      %v858 = vpop.f32.mrb[0].mxu0
      %v859 = vadd.f32 %v746, %v858
      %v860 = vpop.f32.mrb[0].mxu0
      %v861 = vpop.f32.mrb[0].mxu0
      %v862 = vadd.f32 %v746, %v861
      %v863 = vpop.f32.mrb[0].mxu0
      %864 = vdwg.mxu0
      %v865 = vmax.f32 %v827, 0.0
      %v866 = vmax.f32 %v830, 0.0
      %v867 = vmax.f32 %v835, 0.0
      %v868 = vmax.f32 %v838, 0.0
      %v869 = vmax.f32 %v843, 0.0
      %v870 = vmax.f32 %v846, 0.0
      %v871 = vmax.f32 %v851, 0.0
      %v872 = vmax.f32 %v854, 0.0
      %v873 = vmax.f32 %v859, 0.0
      %v874 = vmax.f32 %v862, 0.0
      %875 = vst [vmem:[%s255] sm:$0xff] %v865
      %876 = vst [vmem:[%s255 + $0x8] sm:$0xff] %v866
      %877 = vst [vmem:[%s255 + $0x10] sm:$0xff] %v867
      %878 = vst [vmem:[%s255 + $0x18] sm:$0xff] %v868
      %879 = vst [vmem:[%s255 + $0x20] sm:$0xff] %v869
      %880 = vst [vmem:[%s255 + $0x28] sm:$0xff] %v870
      %881 = vst [vmem:[%s255 + $0x30] sm:$0xff] %v871
      %882 = vst [vmem:[%s255 + $0x38] sm:$0xff] %v872
      %883 = vst [vmem:[%s255 + $0x40] sm:$0xff] %v873
      %884 = vst [vmem:[%s255 + $0x48] sm:$0xff] %v874
      %s885 = smul.u32 10, %s20
      %p886 = scmp.lt.s32.totalorder %s19, 1
      %s887 = scalar_select %p886, %s19, 1
      %p888 = scmp.lt.s32.totalorder %s885, 9
      %s889 = scalar_select %p888, %s885, 9
      %s890 = smul.addr %s887, 10
      %s891 = sadd.s32 %s889, %s890
      %s892 = smul.addr %s891, 8
      %s893 = scalar_lea.vmem %s4, %s892
      // Predicated region
      $region37: #{basic_block_forward.3} parent=35 // pred_check
        %p894 = pneg %p143
      $region38: #{basic_block_forward.3} parent=35 // pred_check_branch
        %896 = sbr.rel (%p894) target = $region40
      $region39: #{basic_block_forward.3} parent=35 // pred_region
        %s897 = smul.u32 10, %s20
      $region40: #{basic_block_forward.3} parent=35 // pred_fallthru
        _
    $region36: #{basic_block_forward.3} parent=5 // pred_fallthru
      _
    %p898 = scmp.le.s32.totalorder 2, %s10
    // Predicated region
    $region41: #{basic_block_forward.3} parent=5 // pred_check
      %p899 = pneg %p898
    $region42: #{basic_block_forward.3} parent=5 // pred_check_branch
      %901 = sbr.rel (%p899) target = $region44
    $region43: #{basic_block_forward.3} parent=5 // pred_region
      %s902 = ssub.s32 %s10, 2
      // Predicated region
      $region45: #{basic_block_forward.3} parent=43 // pred_check
        %p903 = pneg %p149
      $region46: #{basic_block_forward.3} parent=43 // pred_check_branch
        %905 = sbr.rel (%p903) target = $region48
      $region47: #{basic_block_forward.3} parent=43 // pred_region
        %s906 = smul.u32 10, %s22
        %p907 = scmp.lt.s32.totalorder %s21, 1
        %s908 = scalar_select %p907, %s21, 1
        %p909 = scmp.lt.s32.totalorder %s906, 9
        %s910 = scalar_select %p909, %s906, 9
        %s911 = smul.addr %s908, 10
        %s912 = sadd.s32 %s910, %s911
        %s913 = smul.addr %s912, 8
        %s914 = scalar_lea.vmem %s4, %s913
      $region48: #{basic_block_forward.3} parent=43 // pred_fallthru
        _
    $region44: #{basic_block_forward.3} parent=5 // pred_fallthru
      _
  $region6: #{basic_block_forward.3} parent=0 // loop_footer
    %s14 = sadd.s32 1, %s10
  $region7: #{basic_block_forward.3} parent=0 // loop_footer_branch
    %9 = sbr.rel target = $region3
  $region8: #{basic_block_forward.3} parent=0 // loop_exit
    _

</llo_original>
